<compile_context>
chip_gen: v5e
topology: v5e:2x2
jax: 0.10.0
libtpu: 0.0.40
codegen_flags: <defaults>
</compile_context>

<pallas_src>
import math

import jax
import jax.numpy as jnp
from jax.experimental import pallas as pl
from jax.experimental.pallas import tpu as pltpu


FEAT_DIM = 12
MLP_CHANNELS = (128, 256, 256, 1)
BN_EPS = 1e-5


# ---------------------------------------------------------------------------
# Kernel
# ---------------------------------------------------------------------------
def _merger_kernel(x_ref,
                   w1_ref, b1_ref,
                   w2_ref, b2_ref,
                   w3_ref, b3_ref,
                   w4_ref, b4_ref,
                   o_ref):
    """One (batch, point-tile) block through all 4 fused layers.

    x_ref: (1, 12, TN) bf16 — channels on sublanes, points on lanes.
    w*:    (Cout, Cin) bf16 (BN scale pre-folded), b*: (Cout, 1) f32.
    w4:    (256, 1) f32 column (VPU path), b4: (1, 1) f32.
    """
    h = x_ref[0].astype(jnp.bfloat16)                              # (12, TN) (no-op cast)

    # layer 1: 12 -> 128   (MXU, bf16 in / f32 acc)
    h = jnp.dot(w1_ref[...], h, preferred_element_type=jnp.float32)
    h = jnp.maximum(h + b1_ref[...], 0.0).astype(jnp.bfloat16)     # (128, TN)

    # layer 2: 128 -> 256
    h = jnp.dot(w2_ref[...], h, preferred_element_type=jnp.float32)
    h = jnp.maximum(h + b2_ref[...], 0.0).astype(jnp.bfloat16)     # (256, TN)

    # layer 3: 256 -> 256
    h = jnp.dot(w3_ref[...], h, preferred_element_type=jnp.float32)
    h = jnp.maximum(h + b3_ref[...], 0.0)                          # (256, TN) f32

    # layer 4: 256 -> 1   (VPU multiply + sublane reduce; kept off the MXU)
    out = jnp.sum(h * w4_ref[...], axis=0, keepdims=True)          # (1, TN)
    out = jnp.maximum(out + b4_ref[...], 0.0)

    o_ref[0] = out.astype(o_ref.dtype)                             # lane-dense store


# ---------------------------------------------------------------------------
# Parameters (mirror MergerNetwork.__init__ / reset_parameters, eval-mode BN)
# ---------------------------------------------------------------------------
def _xavier_uniform(key, out_ch, in_ch, dtype=jnp.float32):
    # PyTorch xavier_uniform_ on Conv1d weight (out, in, k=1): fan_in=in, fan_out=out.
    bound = math.sqrt(6.0 / (in_ch + out_ch))
    return jax.random.uniform(key, (out_ch, in_ch), dtype=dtype,
                              minval=-bound, maxval=bound)


def init_merger_params(key):
    params = []
    in_ch = FEAT_DIM
    for out_ch in MLP_CHANNELS:
        key, wk = jax.random.split(key)
        w = _xavier_uniform(wk, out_ch, in_ch)            # Conv1d weight (out, in), bias=False
        gamma = jnp.ones((out_ch,), jnp.float32)          # init_bn
        beta = jnp.zeros((out_ch,), jnp.float32)
        run_mean = jnp.zeros((out_ch,), jnp.float32)      # BN defaults
        run_var = jnp.ones((out_ch,), jnp.float32)
        scale = gamma / jnp.sqrt(run_var + BN_EPS)        # eval-mode fold
        bias = beta - run_mean * scale
        params.append((w, scale, bias))
        in_ch = out_ch
    return params


def _fold_params(params):
    """Fold BN scale into conv weights; bf16 for MXU weights, f32 elsewhere."""
    (w1, s1, b1), (w2, s2, b2), (w3, s3, b3), (w4, s4, b4) = params
    w1e = (w1 * s1[:, None]).astype(jnp.bfloat16)                    # (128, 12)
    w2e = (w2 * s2[:, None]).astype(jnp.bfloat16)                    # (256, 128)
    w3e = (w3 * s3[:, None]).astype(jnp.bfloat16)                    # (256, 256)
    w4e = (w4 * s4[:, None]).astype(jnp.float32).reshape(-1, 1)      # (256, 1), VPU path
    return (w1e, b1.reshape(-1, 1).astype(jnp.float32),
            w2e, b2.reshape(-1, 1).astype(jnp.float32),
            w3e, b3.reshape(-1, 1).astype(jnp.float32),
            w4e, b4.reshape(1, 1).astype(jnp.float32))


# ---------------------------------------------------------------------------
# Tiling helpers
# ---------------------------------------------------------------------------
def _round_up(x, m):
    return (x + m - 1) // m * m


def _cdiv(a, b):
    return -(-a // b)


def _tn_cap():
    """Generation-aware lane-tile cap: 8192 on 128-MiB-VMEM parts (v5e/v6e), 4096 on v7x."""
    try:
        vmem = pltpu.get_tpu_info().vmem_capacity_bytes
    except Exception:
        vmem = 64 << 20
    return 8192 if vmem >= (128 << 20) else 4096


def _const_spec(arr):
    # Resident weight/bias block: constant index_map, single-buffered (saves ~0.7 MiB VMEM).
    return pl.BlockSpec(arr.shape, lambda b, n: (0, 0), pipeline_mode=pl.Buffered(1))


# ---------------------------------------------------------------------------
# Forward wrapper
# ---------------------------------------------------------------------------
def merger_network_forward(pairwise_patch_features, params, tn_cap=None):
    """pairwise_patch_features: (B, 12, N) float32  ->  (B, 1, N) float32 (NCW)."""
    B, C, N = pairwise_patch_features.shape
    assert C == FEAT_DIM
    if tn_cap is None:
        tn_cap = _tn_cap()

    # --- lane-axis tiling: bounded padding (<128 wasted cols per tile) ---
    n128 = _round_up(N, 128)
    n_tiles = _cdiv(n128, tn_cap)
    # Guarantee >= 2 grid steps so both v7x TensorCores get work.
    if B == 1 and n_tiles == 1 and n128 >= 256:
        n_tiles = 2
    TN = _round_up(_cdiv(n128, n_tiles), 128)
    N_pad = TN * n_tiles

    # bf16 input: halves per-step input DMA and removes per-tile casts in-kernel.
    x = pairwise_patch_features.astype(jnp.bfloat16)
    if N_pad != N:
        x = jnp.pad(x, ((0, 0), (0, 0), (0, N_pad - N)))   # zero cols, sliced off below

    w1, b1, w2, b2, w3, b3, w4, b4 = _fold_params(params)

    # Advisory cost estimate for XLA's scheduler.
    flops_per_col = 2 * (FEAT_DIM * 128 + 128 * 256 + 256 * 256 + 256)
    weight_bytes = sum(int(a.size) * a.dtype.itemsize
                       for a in (w1, b1, w2, b2, w3, b3, w4, b4))
    cost = pl.CostEstimate(
        flops=flops_per_col * B * N_pad,
        transcendentals=0,
        bytes_accessed=2 * B * FEAT_DIM * N_pad + 4 * B * N_pad + weight_bytes,
    )

    vmem_limit = (64 << 20) if TN > 4096 else (32 << 20)

    out = pl.pallas_call(
        _merger_kernel,
        out_shape=jax.ShapeDtypeStruct((B, 1, N_pad), jnp.float32),
        grid_spec=pltpu.PrefetchScalarGridSpec(
            num_scalar_prefetch=0,
            grid=(B, n_tiles),
            in_specs=[
                pl.BlockSpec((1, FEAT_DIM, TN), lambda b, n: (b, 0, n)),
                _const_spec(w1), _const_spec(b1),
                _const_spec(w2), _const_spec(b2),
                _const_spec(w3), _const_spec(b3),
                _const_spec(w4), _const_spec(b4),
            ],
            out_specs=pl.BlockSpec((1, 1, TN), lambda b, n: (b, 0, n)),
        ),
        compiler_params=pltpu.CompilerParams(
            dimension_semantics=("parallel", "parallel"),
            vmem_limit_bytes=vmem_limit,
        ),
        cost_estimate=cost,
    )(x, w1, b1, w2, b2, w3, b3, w4, b4)

    if N_pad != N:
        # Padded columns hold bias+ReLU garbage; always slice them off here.
        out = out[:, :, :N]
    return out


# ---------------------------------------------------------------------------
# Full-precision reference (true eval-mode PyTorch semantics, f32 throughout)
# ---------------------------------------------------------------------------
def _reference_forward_f32(x, params):
    h = x.astype(jnp.float32)                                       # (B, 12, N)
    for (w, s, b) in params:
        y = jnp.einsum('oi,bin->bon', w * s[:, None], h) + b[None, :, None]
        h = jnp.maximum(y, 0.0)
    return h                                                         # (B, 1, N)


if __name__ == "__main__":
    key = jax.random.PRNGKey(0)
    pkey, xkey, xkey2 = jax.random.split(key, 3)

    params = init_merger_params(pkey)

    # Kernel runs its matmuls in bf16 (f32 accumulation) with bf16 inter-layer
    # casts, so a few-percent drift vs. the pure-f32 reference is expected.
    ATOL = 5e-2
    RTOL = 5e-2

    # Case 1: batch=2, N=300 (non-multiple-of-128 padding, B-parallel grid).
    B, N = 2, 300
    x = jax.random.normal(xkey, (B, FEAT_DIM, N), dtype=jnp.float32)
    out = jax.block_until_ready(merger_network_forward(x, params))
    assert out.shape == (B, 1, N), out.shape
    ref = _reference_forward_f32(x, params)
    err = float(jnp.max(jnp.abs(out - ref)))
    assert jnp.allclose(out, ref, atol=ATOL, rtol=RTOL), err

    # Case 2: batch=1, N=1100 (exercises the >=2-grid-step split + bounded padding).
    B2, N2 = 1, 1100
    x2 = jax.random.normal(xkey2, (B2, FEAT_DIM, N2), dtype=jnp.float32)
    out2 = jax.block_until_ready(merger_network_forward(x2, params))
    assert out2.shape == (B2, 1, N2), out2.shape
    ref2 = _reference_forward_f32(x2, params)
    err2 = float(jnp.max(jnp.abs(out2 - ref2)))
    assert jnp.allclose(out2, ref2, atol=ATOL, rtol=RTOL), err2

    print("KERNEL_OK")
</pallas_src>

<mosaic_0001>
module attributes {stable_mosaic.version = 11 : i64} {
  func.func @_merger_kernel(%arg0: i32, %arg1: i32, %arg2: memref<1x12x384xbf16, #tpu.memory_space<vmem>>, %arg3: memref<128x12xbf16, #tpu.memory_space<vmem>>, %arg4: memref<128x1xf32, #tpu.memory_space<vmem>>, %arg5: memref<256x128xbf16, #tpu.memory_space<vmem>>, %arg6: memref<256x1xf32, #tpu.memory_space<vmem>>, %arg7: memref<256x256xbf16, #tpu.memory_space<vmem>>, %arg8: memref<256x1xf32, #tpu.memory_space<vmem>>, %arg9: memref<256x1xf32, #tpu.memory_space<vmem>>, %arg10: memref<1x1xf32, #tpu.memory_space<vmem>>, %arg11: memref<1x1x384xf32, #tpu.memory_space<vmem>>) attributes {dimension_semantics = [#tpu.dimension_semantics<parallel>, #tpu.dimension_semantics<parallel>], iteration_bounds = array<i64: 2, 1>, scalar_prefetch = 0 : i64, scratch_operands = 0 : i64, tpu.core_type = #tpu.core_type<tc>, window_params = [{transform_indices = @transform_0, window_bounds = array<i64: 1, 12, 384>}, {pipeline_mode = #tpu.pipeline_mode<synchronous>, transform_indices = @transform_1, window_bounds = array<i64: 128, 12>}, {pipeline_mode = #tpu.pipeline_mode<synchronous>, transform_indices = @transform_2, window_bounds = array<i64: 128, 1>}, {pipeline_mode = #tpu.pipeline_mode<synchronous>, transform_indices = @transform_3, window_bounds = array<i64: 256, 128>}, {pipeline_mode = #tpu.pipeline_mode<synchronous>, transform_indices = @transform_4, window_bounds = array<i64: 256, 1>}, {pipeline_mode = #tpu.pipeline_mode<synchronous>, transform_indices = @transform_5, window_bounds = array<i64: 256, 256>}, {pipeline_mode = #tpu.pipeline_mode<synchronous>, transform_indices = @transform_6, window_bounds = array<i64: 256, 1>}, {pipeline_mode = #tpu.pipeline_mode<synchronous>, transform_indices = @transform_7, window_bounds = array<i64: 256, 1>}, {pipeline_mode = #tpu.pipeline_mode<synchronous>, transform_indices = @transform_8, window_bounds = array<i64: 1, 1>}, {transform_indices = @transform_9, window_bounds = array<i64: 1, 1, 384>}]} {
    %c0 = arith.constant 0 : index
    %c0_0 = arith.constant 0 : index
    %c0_1 = arith.constant 0 : index
    %0 = vector.load %arg2[%c0, %c0_0, %c0_1] : memref<1x12x384xbf16, #tpu.memory_space<vmem>>, vector<1x12x384xbf16>
    %1 = vector.shape_cast %0 : vector<1x12x384xbf16> to vector<12x384xbf16>
    %c0_2 = arith.constant 0 : index
    %c0_3 = arith.constant 0 : index
    %2 = vector.load %arg3[%c0_2, %c0_3] : memref<128x12xbf16, #tpu.memory_space<vmem>>, vector<128x12xbf16>
    %cst = arith.constant dense<0.000000e+00> : vector<128x384xf32>
    %3 = tpu.matmul %2, %1, %cst {dimension_numbers = #tpu.dot_dimension_numbers<[1], [0], [0], [1], [0, 0, 1, 1], [], []>} : vector<128x12xbf16>, vector<12x384xbf16>, vector<128x384xf32> -> vector<128x384xf32>
    %c0_4 = arith.constant 0 : index
    %c0_5 = arith.constant 0 : index
    %4 = vector.load %arg4[%c0_4, %c0_5] : memref<128x1xf32, #tpu.memory_space<vmem>>, vector<128x1xf32>
    %5 = vector.broadcast %4 : vector<128x1xf32> to vector<128x384xf32>
    %6 = arith.addf %3, %5 : vector<128x384xf32>
    %cst_6 = arith.constant 0.000000e+00 : f32
    %7 = vector.broadcast %cst_6 : f32 to vector<128x384xf32>
    %8 = arith.maximumf %6, %7 : vector<128x384xf32>
    %9 = arith.truncf %8 : vector<128x384xf32> to vector<128x384xbf16>
    %c0_7 = arith.constant 0 : index
    %c0_8 = arith.constant 0 : index
    %10 = vector.load %arg5[%c0_7, %c0_8] : memref<256x128xbf16, #tpu.memory_space<vmem>>, vector<256x128xbf16>
    %cst_9 = arith.constant dense<0.000000e+00> : vector<256x384xf32>
    %11 = tpu.matmul %10, %9, %cst_9 {dimension_numbers = #tpu.dot_dimension_numbers<[1], [0], [0], [1], [0, 0, 1, 1], [], []>} : vector<256x128xbf16>, vector<128x384xbf16>, vector<256x384xf32> -> vector<256x384xf32>
    %c0_10 = arith.constant 0 : index
    %c0_11 = arith.constant 0 : index
    %12 = vector.load %arg6[%c0_10, %c0_11] : memref<256x1xf32, #tpu.memory_space<vmem>>, vector<256x1xf32>
    %13 = vector.broadcast %12 : vector<256x1xf32> to vector<256x384xf32>
    %14 = arith.addf %11, %13 : vector<256x384xf32>
    %cst_12 = arith.constant 0.000000e+00 : f32
    %15 = vector.broadcast %cst_12 : f32 to vector<256x384xf32>
    %16 = arith.maximumf %14, %15 : vector<256x384xf32>
    %17 = arith.truncf %16 : vector<256x384xf32> to vector<256x384xbf16>
    %c0_13 = arith.constant 0 : index
    %c0_14 = arith.constant 0 : index
    %18 = vector.load %arg7[%c0_13, %c0_14] : memref<256x256xbf16, #tpu.memory_space<vmem>>, vector<256x256xbf16>
    %cst_15 = arith.constant dense<0.000000e+00> : vector<256x384xf32>
    %19 = tpu.matmul %18, %17, %cst_15 {dimension_numbers = #tpu.dot_dimension_numbers<[1], [0], [0], [1], [0, 0, 1, 1], [], []>} : vector<256x256xbf16>, vector<256x384xbf16>, vector<256x384xf32> -> vector<256x384xf32>
    %c0_16 = arith.constant 0 : index
    %c0_17 = arith.constant 0 : index
    %20 = vector.load %arg8[%c0_16, %c0_17] : memref<256x1xf32, #tpu.memory_space<vmem>>, vector<256x1xf32>
    %21 = vector.broadcast %20 : vector<256x1xf32> to vector<256x384xf32>
    %22 = arith.addf %19, %21 : vector<256x384xf32>
    %cst_18 = arith.constant 0.000000e+00 : f32
    %23 = vector.broadcast %cst_18 : f32 to vector<256x384xf32>
    %24 = arith.maximumf %22, %23 : vector<256x384xf32>
    %c0_19 = arith.constant 0 : index
    %c0_20 = arith.constant 0 : index
    %25 = vector.load %arg9[%c0_19, %c0_20] : memref<256x1xf32, #tpu.memory_space<vmem>>, vector<256x1xf32>
    %26 = vector.broadcast %25 : vector<256x1xf32> to vector<256x384xf32>
    %27 = arith.mulf %24, %26 : vector<256x384xf32>
    %cst_21 = arith.constant dense<0.000000e+00> : vector<384xf32>
    %28 = vector.multi_reduction <add>, %27, %cst_21 [0] : vector<256x384xf32> to vector<384xf32>
    %29 = vector.shape_cast %28 : vector<384xf32> to vector<1x384xf32>
    %c0_22 = arith.constant 0 : index
    %c0_23 = arith.constant 0 : index
    %30 = vector.load %arg10[%c0_22, %c0_23] : memref<1x1xf32, #tpu.memory_space<vmem>>, vector<1x1xf32>
    %31 = vector.broadcast %30 : vector<1x1xf32> to vector<1x384xf32>
    %32 = arith.addf %29, %31 : vector<1x384xf32>
    %cst_24 = arith.constant 0.000000e+00 : f32
    %33 = vector.broadcast %cst_24 : f32 to vector<1x384xf32>
    %34 = arith.maximumf %32, %33 : vector<1x384xf32>
    %c0_25 = arith.constant 0 : index
    %c0_26 = arith.constant 0 : index
    %c0_27 = arith.constant 0 : index
    %35 = vector.load %arg11[%c0_25, %c0_26, %c0_27] : memref<1x1x384xf32, #tpu.memory_space<vmem>>, vector<1x1x384xf32>
    %36 = vector.shape_cast %35 : vector<1x1x384xf32> to vector<1x384xf32>
    %37 = vector.shape_cast %34 : vector<1x384xf32> to vector<1x1x384xf32>
    tpu.vector_store %arg11[%c0_25, %c0_26, %c0_27], %37 {strides = array<i32>} : memref<1x1x384xf32, #tpu.memory_space<vmem>>, vector<1x1x384xf32>,
    return
  }
  func.func @transform_0(%arg0: i32, %arg1: i32) -> (i32, i32, i32) {
    %c0_i32 = arith.constant 0 : i32
    %c0_i32_0 = arith.constant 0 : i32
    return %arg0, %c0_i32, %arg1 : i32, i32, i32
  }
  func.func @transform_1(%arg0: i32, %arg1: i32) -> (i32, i32) {
    %c0_i32 = arith.constant 0 : i32
    %c0_i32_0 = arith.constant 0 : i32
    %c0_i32_1 = arith.constant 0 : i32
    return %c0_i32, %c0_i32_0 : i32, i32
  }
  func.func @transform_2(%arg0: i32, %arg1: i32) -> (i32, i32) {
    %c0_i32 = arith.constant 0 : i32
    %c0_i32_0 = arith.constant 0 : i32
    %c0_i32_1 = arith.constant 0 : i32
    return %c0_i32, %c0_i32_0 : i32, i32
  }
  func.func @transform_3(%arg0: i32, %arg1: i32) -> (i32, i32) {
    %c0_i32 = arith.constant 0 : i32
    %c0_i32_0 = arith.constant 0 : i32
    %c0_i32_1 = arith.constant 0 : i32
    return %c0_i32, %c0_i32_0 : i32, i32
  }
  func.func @transform_4(%arg0: i32, %arg1: i32) -> (i32, i32) {
    %c0_i32 = arith.constant 0 : i32
    %c0_i32_0 = arith.constant 0 : i32
    %c0_i32_1 = arith.constant 0 : i32
    return %c0_i32, %c0_i32_0 : i32, i32
  }
  func.func @transform_5(%arg0: i32, %arg1: i32) -> (i32, i32) {
    %c0_i32 = arith.constant 0 : i32
    %c0_i32_0 = arith.constant 0 : i32
    %c0_i32_1 = arith.constant 0 : i32
    return %c0_i32, %c0_i32_0 : i32, i32
  }
  func.func @transform_6(%arg0: i32, %arg1: i32) -> (i32, i32) {
    %c0_i32 = arith.constant 0 : i32
    %c0_i32_0 = arith.constant 0 : i32
    %c0_i32_1 = arith.constant 0 : i32
    return %c0_i32, %c0_i32_0 : i32, i32
  }
  func.func @transform_7(%arg0: i32, %arg1: i32) -> (i32, i32) {
    %c0_i32 = arith.constant 0 : i32
    %c0_i32_0 = arith.constant 0 : i32
    %c0_i32_1 = arith.constant 0 : i32
    return %c0_i32, %c0_i32_0 : i32, i32
  }
  func.func @transform_8(%arg0: i32, %arg1: i32) -> (i32, i32) {
    %c0_i32 = arith.constant 0 : i32
    %c0_i32_0 = arith.constant 0 : i32
    %c0_i32_1 = arith.constant 0 : i32
    return %c0_i32, %c0_i32_0 : i32, i32
  }
  func.func @transform_9(%arg0: i32, %arg1: i32) -> (i32, i32, i32) {
    %c0_i32 = arith.constant 0 : i32
    %c0_i32_0 = arith.constant 0 : i32
    return %arg0, %c0_i32, %arg1 : i32, i32, i32
  }
}

</mosaic_0001>

<llo_original>
// kernel: tpu_custom_call.1
$region0: #{tpu_custom_call.1}
  #allocation0 [shape = 'u32[]', space=smem, size = 0x4, offset = 0x4, fixed_abs, tag = 'smem constant byte address 0x4 - core index']
  #allocation1 [shape = 'u32[72,128]{1,0:T(1,128)}', space=vmem, size = 0x9000, scoped, tag = 'internal scratch']
  #allocation2 [shape = 'f32[1,1]{1,0:T(1,128)S(1)}', space=vmem, size = 0x200, scoped, tag = 'scoped memory for tpu_custom_call.1']
  %s0 = inlined_call_operand.vmem [shape: bf16[2,12,384], index: 0, kind: input, shape index: {}]
  %s1 = inlined_call_operand.vmem [shape: bf16[128,12], index: 1, kind: input, shape index: {}]
  %s2 = inlined_call_operand.vmem [shape: f32[128,1], index: 2, kind: input, shape index: {}]
  %s3 = inlined_call_operand.vmem [shape: bf16[256,128], index: 3, kind: input, shape index: {}]
  %s4 = inlined_call_operand.vmem [shape: f32[256,1], index: 4, kind: input, shape index: {}]
  %s5 = inlined_call_operand.vmem [shape: bf16[256,256], index: 5, kind: input, shape index: {}]
  %s6 = inlined_call_operand.vmem [shape: f32[256,1], index: 6, kind: input, shape index: {}]
  %s7 = inlined_call_operand.vmem [shape: f32[256,1], index: 7, kind: input, shape index: {}]
  %s8 = inlined_call_operand.<no memory space> [shape: f32[1,1], index: 8, kind: input, shape index: {}]
  %s9 = inlined_call_operand.hbm [shape: f32[2,1,384], index: 9, kind: output, shape index: {}]
  %s10 = sld [smem:[#allocation0]]
  $region69: #{tpu_custom_call.1} parent=0
    _
  %s12 = ssub.s32 1, %s10
  %s13 = scalar_select 0, %s12, %s10
  %v14 = vstv %s8
  %15 = vst [vmem:[#allocation2] sm:$0x1] %v14
  $region1: #{tpu_custom_call.1} parent=0
    #allocation3 [shape = 'u8[3072]{0}', space=vmem, size = 0xc00, scoped, tag = 'output window, operand 0']
    #allocation4 [shape = 's32[2]{0}', space=sflag, size = 0x8, scoped, tag = 'scoped memory for tpu_custom_call.1']
    %16 = vsyncpa [#allocation4], 0
    %s17 = scalar_lea.sflag [#allocation4], 1
    %18 = vsyncpa %s17, 0
    loop: start=0, step=1, limit=4
    $region2: #{tpu_custom_call.1} parent=1 // loop_pre_header
      _
    $region3: #{tpu_custom_call.1} parent=1 // loop_header
      %s20 = sphi 0, %s24
      %p21 = scmp.ge.s32.totalorder %s20, 4
      %s27 = sphi 0, %s39
      %s28 = sphi 0, %s35
      %s29 = sphi 0, %s27
      %s30 = sphi 0, %s28
      %s31 = sphi 0, %s29
      %s32 = sphi 0, %s30
      %s44 = sphi 0, %s46
      %s47 = sphi 0, %s44
      %s48 = sphi 0, %s47
      %s64 = sphi 0, %s48
      %s68 = sphi 0, %s68
      %s70 = sphi 0, %s68
      %s71 = sphi 0, %s70
      %s85 = sphi 0, %s71
      %s89 = sphi 0, %s89
      %s91 = sphi 0, %s89
      %s92 = sphi 0, %s91
      %s106 = sphi 0, %s92
      %s110 = sphi 0, %s110
      %s112 = sphi 0, %s110
      %s113 = sphi 0, %s112
      %s127 = sphi 0, %s113
      %s131 = sphi 0, %s131
      %s133 = sphi 0, %s131
      %s134 = sphi 0, %s133
      %s148 = sphi 0, %s134
      %s152 = sphi 0, %s152
      %s154 = sphi 0, %s152
      %s155 = sphi 0, %s154
      %s169 = sphi 0, %s155
      %s173 = sphi 0, %s173
      %s175 = sphi 0, %s173
      %s176 = sphi 0, %s175
      %s190 = sphi 0, %s176
      %s194 = sphi 0, %s194
      %s196 = sphi 0, %s194
      %s197 = sphi 0, %s196
      %s211 = sphi 0, %s197
      %s215 = sphi 0, %s215
      %s217 = sphi 0, %s215
      %s218 = sphi 0, %s217
      %s232 = sphi 0, %s218
      %s240 = sphi 0, %s242
      %s243 = sphi 0, %s240
      %s244 = sphi 0, %s243
      %s260 = sphi 0, %s244
    $region4: #{tpu_custom_call.1} parent=1 // loop_header_branch
      %23 = sbr.rel (%p21) target = $region8
    $region5: #{tpu_custom_call.1} parent=1 // loop_body
      %s25 = ssub.s32 %s20, 1
      %s26 = ssub.s32 %s20, 2
      %s33 = sadd.s32 1, %s28
      %p34 = scmp.ge.s32.totalorder %s33, 1
      %s35 = scalar_select %p34, 0, %s33
      %s36 = sadd.s32 1, %s27
      %s37 = scalar_select %p34, %s36, %s27
      %p38 = scmp.ge.s32.totalorder %s37, 2
      %s39 = scalar_select %p38, 0, %s37
      %s40 = ssub.s32 %s27, %s39
      %s41 = ssub.s32 %s28, %s35
      %s42 = sor.u32 %s40, %s41
      %p43 = scmp.eq.s32.totalorder %s42, 0
      %s45 = sadd.s32 %s44, 1
      %s46 = scalar_select %p43, %s44, %s45
      %p49 = pneg %p43
      %p50 = scmp.eq.s32.totalorder %s20, 1
      %p51 = por %p49, %p50
      %p52 = scmp.ne.s32.totalorder %s44, %s47
      %p53 = scmp.eq.s32.totalorder %s20, 0
      %p54 = por %p52, %p53
      %p55 = scmp.ne.s32.totalorder %s44, %s47
      %p56 = scmp.eq.s32.totalorder %s25, 1
      %p57 = por %p55, %p56
      %p58 = scmp.ne.s32.totalorder %s47, %s48
      %p59 = scmp.eq.s32.totalorder %s25, 0
      %p60 = por %p58, %p59
      %p61 = scmp.ne.s32.totalorder %s47, %s48
      %p62 = scmp.eq.s32.totalorder %s26, 1
      %p63 = por %p61, %p62
      %p65 = scmp.ne.s32.totalorder %s48, %s64
      %p66 = scmp.eq.s32.totalorder %s26, 0
      %p67 = por %p65, %p66
      %s69 = sadd.s32 %s68, 1
      %p72 = scmp.eq.s32.totalorder %s20, 1
      %p73 = scmp.ne.s32.totalorder %s68, %s70
      %p74 = scmp.eq.s32.totalorder %s20, 0
      %p75 = por %p73, %p74
      %p76 = scmp.ne.s32.totalorder %s68, %s70
      %p77 = scmp.eq.s32.totalorder %s25, 1
      %p78 = por %p76, %p77
      %p79 = scmp.ne.s32.totalorder %s70, %s71
      %p80 = scmp.eq.s32.totalorder %s25, 0
      %p81 = por %p79, %p80
      %p82 = scmp.ne.s32.totalorder %s70, %s71
      %p83 = scmp.eq.s32.totalorder %s26, 1
      %p84 = por %p82, %p83
      %p86 = scmp.ne.s32.totalorder %s71, %s85
      %p87 = scmp.eq.s32.totalorder %s26, 0
      %p88 = por %p86, %p87
      %s90 = sadd.s32 %s89, 1
      %p93 = scmp.eq.s32.totalorder %s20, 1
      %p94 = scmp.ne.s32.totalorder %s89, %s91
      %p95 = scmp.eq.s32.totalorder %s20, 0
      %p96 = por %p94, %p95
      %p97 = scmp.ne.s32.totalorder %s89, %s91
      %p98 = scmp.eq.s32.totalorder %s25, 1
      %p99 = por %p97, %p98
      %p100 = scmp.ne.s32.totalorder %s91, %s92
      %p101 = scmp.eq.s32.totalorder %s25, 0
      %p102 = por %p100, %p101
      %p103 = scmp.ne.s32.totalorder %s91, %s92
      %p104 = scmp.eq.s32.totalorder %s26, 1
      %p105 = por %p103, %p104
      %p107 = scmp.ne.s32.totalorder %s92, %s106
      %p108 = scmp.eq.s32.totalorder %s26, 0
      %p109 = por %p107, %p108
      %s111 = sadd.s32 %s110, 1
      %p114 = scmp.eq.s32.totalorder %s20, 1
      %p115 = scmp.ne.s32.totalorder %s110, %s112
      %p116 = scmp.eq.s32.totalorder %s20, 0
      %p117 = por %p115, %p116
      %p118 = scmp.ne.s32.totalorder %s110, %s112
      %p119 = scmp.eq.s32.totalorder %s25, 1
      %p120 = por %p118, %p119
      %p121 = scmp.ne.s32.totalorder %s112, %s113
      %p122 = scmp.eq.s32.totalorder %s25, 0
      %p123 = por %p121, %p122
      %p124 = scmp.ne.s32.totalorder %s112, %s113
      %p125 = scmp.eq.s32.totalorder %s26, 1
      %p126 = por %p124, %p125
      %p128 = scmp.ne.s32.totalorder %s113, %s127
      %p129 = scmp.eq.s32.totalorder %s26, 0
      %p130 = por %p128, %p129
      %s132 = sadd.s32 %s131, 1
      %p135 = scmp.eq.s32.totalorder %s20, 1
      %p136 = scmp.ne.s32.totalorder %s131, %s133
      %p137 = scmp.eq.s32.totalorder %s20, 0
      %p138 = por %p136, %p137
      %p139 = scmp.ne.s32.totalorder %s131, %s133
      %p140 = scmp.eq.s32.totalorder %s25, 1
      %p141 = por %p139, %p140
      %p142 = scmp.ne.s32.totalorder %s133, %s134
      %p143 = scmp.eq.s32.totalorder %s25, 0
      %p144 = por %p142, %p143
      %p145 = scmp.ne.s32.totalorder %s133, %s134
      %p146 = scmp.eq.s32.totalorder %s26, 1
      %p147 = por %p145, %p146
      %p149 = scmp.ne.s32.totalorder %s134, %s148
      %p150 = scmp.eq.s32.totalorder %s26, 0
      %p151 = por %p149, %p150
      %s153 = sadd.s32 %s152, 1
      %p156 = scmp.eq.s32.totalorder %s20, 1
      %p157 = scmp.ne.s32.totalorder %s152, %s154
      %p158 = scmp.eq.s32.totalorder %s20, 0
      %p159 = por %p157, %p158
      %p160 = scmp.ne.s32.totalorder %s152, %s154
      %p161 = scmp.eq.s32.totalorder %s25, 1
      %p162 = por %p160, %p161
      %p163 = scmp.ne.s32.totalorder %s154, %s155
      %p164 = scmp.eq.s32.totalorder %s25, 0
      %p165 = por %p163, %p164
      %p166 = scmp.ne.s32.totalorder %s154, %s155
      %p167 = scmp.eq.s32.totalorder %s26, 1
      %p168 = por %p166, %p167
      %p170 = scmp.ne.s32.totalorder %s155, %s169
      %p171 = scmp.eq.s32.totalorder %s26, 0
      %p172 = por %p170, %p171
      %s174 = sadd.s32 %s173, 1
      %p177 = scmp.eq.s32.totalorder %s20, 1
      %p178 = scmp.ne.s32.totalorder %s173, %s175
      %p179 = scmp.eq.s32.totalorder %s20, 0
      %p180 = por %p178, %p179
      %p181 = scmp.ne.s32.totalorder %s173, %s175
      %p182 = scmp.eq.s32.totalorder %s25, 1
      %p183 = por %p181, %p182
      %p184 = scmp.ne.s32.totalorder %s175, %s176
      %p185 = scmp.eq.s32.totalorder %s25, 0
      %p186 = por %p184, %p185
      %p187 = scmp.ne.s32.totalorder %s175, %s176
      %p188 = scmp.eq.s32.totalorder %s26, 1
      %p189 = por %p187, %p188
      %p191 = scmp.ne.s32.totalorder %s176, %s190
      %p192 = scmp.eq.s32.totalorder %s26, 0
      %p193 = por %p191, %p192
      %s195 = sadd.s32 %s194, 1
      %p198 = scmp.eq.s32.totalorder %s20, 1
      %p199 = scmp.ne.s32.totalorder %s194, %s196
      %p200 = scmp.eq.s32.totalorder %s20, 0
      %p201 = por %p199, %p200
      %p202 = scmp.ne.s32.totalorder %s194, %s196
      %p203 = scmp.eq.s32.totalorder %s25, 1
      %p204 = por %p202, %p203
      %p205 = scmp.ne.s32.totalorder %s196, %s197
      %p206 = scmp.eq.s32.totalorder %s25, 0
      %p207 = por %p205, %p206
      %p208 = scmp.ne.s32.totalorder %s196, %s197
      %p209 = scmp.eq.s32.totalorder %s26, 1
      %p210 = por %p208, %p209
      %p212 = scmp.ne.s32.totalorder %s197, %s211
      %p213 = scmp.eq.s32.totalorder %s26, 0
      %p214 = por %p212, %p213
      %s216 = sadd.s32 %s215, 1
      %p219 = scmp.eq.s32.totalorder %s20, 1
      %p220 = scmp.ne.s32.totalorder %s215, %s217
      %p221 = scmp.eq.s32.totalorder %s20, 0
      %p222 = por %p220, %p221
      %p223 = scmp.ne.s32.totalorder %s215, %s217
      %p224 = scmp.eq.s32.totalorder %s25, 1
      %p225 = por %p223, %p224
      %p226 = scmp.ne.s32.totalorder %s217, %s218
      %p227 = scmp.eq.s32.totalorder %s25, 0
      %p228 = por %p226, %p227
      %p229 = scmp.ne.s32.totalorder %s217, %s218
      %p230 = scmp.eq.s32.totalorder %s26, 1
      %p231 = por %p229, %p230
      %p233 = scmp.ne.s32.totalorder %s218, %s232
      %p234 = scmp.eq.s32.totalorder %s26, 0
      %p235 = por %p233, %p234
      %s236 = ssub.s32 %s27, %s39
      %s237 = ssub.s32 %s28, %s35
      %s238 = sor.u32 %s236, %s237
      %p239 = scmp.eq.s32.totalorder %s238, 0
      %s241 = sadd.s32 %s240, 1
      %s242 = scalar_select %p239, %s240, %s241
      %p245 = pneg %p239
      %p246 = scmp.eq.s32.totalorder %s20, 1
      %p247 = por %p245, %p246
      %p248 = scmp.ne.s32.totalorder %s240, %s243
      %p249 = scmp.eq.s32.totalorder %s20, 0
      %p250 = por %p248, %p249
      %p251 = scmp.ne.s32.totalorder %s240, %s243
      %p252 = scmp.eq.s32.totalorder %s25, 1
      %p253 = por %p251, %p252
      %p254 = scmp.ne.s32.totalorder %s243, %s244
      %p255 = scmp.eq.s32.totalorder %s25, 0
      %p256 = por %p254, %p255
      %p257 = scmp.ne.s32.totalorder %s243, %s244
      %p258 = scmp.eq.s32.totalorder %s26, 1
      %p259 = por %p257, %p258
      %p261 = scmp.ne.s32.totalorder %s244, %s260
      %p262 = scmp.eq.s32.totalorder %s26, 0
      %p263 = por %p261, %p262
      %p264 = scmp.le.s32.totalorder 1, %s20
      %p265 = scmp.lt.s32.totalorder %s20, 3
      %p266 = pnand %p264, %p265
      %p267 = pneg %p266
      // Predicated region
      $region9: #{tpu_custom_call.1} parent=5 // pred_check
        _
      $region10: #{tpu_custom_call.1} parent=5 // pred_check_branch
        %269 = sbr.rel (%p266) target = $region12
      $region11: #{tpu_custom_call.1} parent=5 // pred_region
        %s270 = ssub.s32 %s20, 1
        // Predicated region
        $region13: #{tpu_custom_call.1} parent=11 // pred_check
          %p271 = pneg %p81
        $region14: #{tpu_custom_call.1} parent=11 // pred_check_branch
          %273 = sbr.rel (%p271) target = $region16
        $region15: #{tpu_custom_call.1} parent=11 // pred_region
          _
        $region16: #{tpu_custom_call.1} parent=11 // pred_fallthru
          _
        // Predicated region
        $region17: #{tpu_custom_call.1} parent=11 // pred_check
          %p274 = pneg %p102
        $region18: #{tpu_custom_call.1} parent=11 // pred_check_branch
          %276 = sbr.rel (%p274) target = $region20
        $region19: #{tpu_custom_call.1} parent=11 // pred_region
          _
        $region20: #{tpu_custom_call.1} parent=11 // pred_fallthru
          _
        // Predicated region
        $region21: #{tpu_custom_call.1} parent=11 // pred_check
          %p277 = pneg %p123
        $region22: #{tpu_custom_call.1} parent=11 // pred_check_branch
          %279 = sbr.rel (%p277) target = $region24
        $region23: #{tpu_custom_call.1} parent=11 // pred_region
          _
        $region24: #{tpu_custom_call.1} parent=11 // pred_fallthru
          _
        // Predicated region
        $region25: #{tpu_custom_call.1} parent=11 // pred_check
          %p280 = pneg %p144
        $region26: #{tpu_custom_call.1} parent=11 // pred_check_branch
          %282 = sbr.rel (%p280) target = $region28
        $region27: #{tpu_custom_call.1} parent=11 // pred_region
          _
        $region28: #{tpu_custom_call.1} parent=11 // pred_fallthru
          _
        // Predicated region
        $region29: #{tpu_custom_call.1} parent=11 // pred_check
          %p283 = pneg %p165
        $region30: #{tpu_custom_call.1} parent=11 // pred_check_branch
          %285 = sbr.rel (%p283) target = $region32
        $region31: #{tpu_custom_call.1} parent=11 // pred_region
          _
        $region32: #{tpu_custom_call.1} parent=11 // pred_fallthru
          _
        // Predicated region
        $region33: #{tpu_custom_call.1} parent=11 // pred_check
          %p286 = pneg %p186
        $region34: #{tpu_custom_call.1} parent=11 // pred_check_branch
          %288 = sbr.rel (%p286) target = $region36
        $region35: #{tpu_custom_call.1} parent=11 // pred_region
          _
        $region36: #{tpu_custom_call.1} parent=11 // pred_fallthru
          _
        // Predicated region
        $region37: #{tpu_custom_call.1} parent=11 // pred_check
          %p289 = pneg %p207
        $region38: #{tpu_custom_call.1} parent=11 // pred_check_branch
          %291 = sbr.rel (%p289) target = $region40
        $region39: #{tpu_custom_call.1} parent=11 // pred_region
          _
        $region40: #{tpu_custom_call.1} parent=11 // pred_fallthru
          _
        // Predicated region
        $region41: #{tpu_custom_call.1} parent=11 // pred_check
          %p292 = pneg %p228
        $region42: #{tpu_custom_call.1} parent=11 // pred_check_branch
          %294 = sbr.rel (%p292) target = $region44
        $region43: #{tpu_custom_call.1} parent=11 // pred_region
          _
        $region44: #{tpu_custom_call.1} parent=11 // pred_fallthru
          _
      $region12: #{tpu_custom_call.1} parent=5 // pred_fallthru
        _
      %p295 = scmp.lt.s32.totalorder %s20, 2
      // Predicated region
      $region45: #{tpu_custom_call.1} parent=5 // pred_check
        %p296 = pneg %p295
      $region46: #{tpu_custom_call.1} parent=5 // pred_check_branch
        %298 = sbr.rel (%p296) target = $region48
      $region47: #{tpu_custom_call.1} parent=5 // pred_region
        // Predicated region
        $region49: #{tpu_custom_call.1} parent=47 // pred_check
          %p299 = pneg %p54
        $region50: #{tpu_custom_call.1} parent=47 // pred_check_branch
          %301 = sbr.rel (%p299) target = $region52
        $region51: #{tpu_custom_call.1} parent=47 // pred_region
          %s302 = smul.u32 3, %s28
          %p303 = scmp.lt.s32.totalorder %s27, 1
          %s304 = scalar_select %p303, %s27, 1
          %p305 = scmp.lt.s32.totalorder %s302, 2
          %s306 = scalar_select %p305, %s302, 2
          %s307 = smul.addr %s304, 6
          %s308 = sadd.s32 %s306, %s307
          %s309 = smul.addr %s308, 4
          %s310 = scalar_lea.vmem %s0, %s309
          %s311 = smul.u32 3, %s28
        $region52: #{tpu_custom_call.1} parent=47 // pred_fallthru
          _
      $region48: #{tpu_custom_call.1} parent=5 // pred_fallthru
        _
      %p312 = scmp.le.s32.totalorder 1, %s20
      %p313 = scmp.lt.s32.totalorder %s20, 3
      %p314 = pnand %p312, %p313
      %p315 = pneg %p314
      // Predicated region
      $region53: #{tpu_custom_call.1} parent=5 // pred_check
        _
      $region54: #{tpu_custom_call.1} parent=5 // pred_check_branch
        %317 = sbr.rel (%p314) target = $region56
      $region55: #{tpu_custom_call.1} parent=5 // pred_region
        %s318 = ssub.s32 %s20, 1
        %s319 = smul.u32 3, %s30
        %p320 = scmp.lt.s32.totalorder %s29, 1
        %s321 = scalar_select %p320, %s29, 1
        %p322 = scmp.lt.s32.totalorder %s319, 2
        %s323 = scalar_select %p322, %s319, 2
        %s324 = smul.addr %s321, 6
        %s325 = sadd.s32 %s323, %s324
        %s326 = smul.addr %s325, 4
        %s327 = scalar_lea.vmem %s0, %s326
        %p328 = pneg %p60
        %p329 = pneg %p57
        %p330 = pneg %p81
        %p331 = pneg %p78
        %p332 = pneg %p102
        %p333 = pneg %p99
        %p334 = pneg %p123
        %p335 = pneg %p120
        %p336 = pneg %p144
        %p337 = pneg %p141
        %p338 = pneg %p165
        %p339 = pneg %p162
        %p340 = pneg %p186
        %p341 = pneg %p183
        %p342 = pneg %p207
        %p343 = pneg %p204
        %p344 = pneg %p228
        %p345 = pneg %p225
        %p346 = pneg %p256
        %p347 = pneg %p253
        %s348 = sand.u32 %s243, 1
        %s349 = scalar_lea.sflag [#allocation4], %s348
        %s350 = sand.u32 %s243, 1
        %s351 = smul.addr %s350, 3
        %s352 = scalar_lea.vmem [#allocation3], %s351
        %s353 = smul.u32 3, %s30
        %p354 = scmp.lt.s32.totalorder %s29, 1
        %s355 = scalar_select %p354, %s29, 1
        %p356 = scmp.lt.s32.totalorder %s353, 2
        %s357 = scalar_select %p356, %s353, 2
        %s358 = smul.addr %s355, 6
        %s359 = sadd.s32 %s357, %s358
        %s360 = smul.addr %s359, 4
        %s361 = scalar_lea.vmem %s0, %s360
        %s362 = smul.u32 3, %s30
        %s363 = smul.u32 3, %s30
        %v365 = vld [vmem:[%s361] sm:$0xff]
        %v366 = vld [vmem:[%s361 + $0x8] sm:$0xf]
        %v367 = vld [vmem:[%s361 + $0xc] sm:$0x33]
        %v368 = vld [vmem:[%s361 + $0x14] sm:$0x3]
        %v369 = vld [vmem:[%s1] sm:$0xf]
        %v370 = vld [vmem:[%s1 + $0x4] sm:$0xf]
        %v371 = vld [vmem:[%s1 + $0x8] sm:$0xf]
        %v372 = vld [vmem:[%s1 + $0xc] sm:$0xf]
        %v373 = vld [vmem:[%s1 + $0x10] sm:$0xf]
        %v374 = vld [vmem:[%s1 + $0x14] sm:$0xf]
        %v375 = vld [vmem:[%s1 + $0x18] sm:$0xf]
        %v376 = vld [vmem:[%s1 + $0x1c] sm:$0xf]
        %v377 = vld [vmem:[%s1 + $0x20] sm:$0xf]
        %v378 = vld [vmem:[%s1 + $0x24] sm:$0xf]
        %v379 = vld [vmem:[%s1 + $0x28] sm:$0xf]
        %v380 = vld [vmem:[%s1 + $0x2c] sm:$0xf]
        %v381 = vld [vmem:[%s1 + $0x30] sm:$0xf]
        %v382 = vld [vmem:[%s1 + $0x34] sm:$0xf]
        %v383 = vld [vmem:[%s1 + $0x38] sm:$0xf]
        %v384 = vld [vmem:[%s1 + $0x3c] sm:$0xf]
        %v385 = vld [vmem:[%s2] sm:$0xff]
        %v386 = vld [vmem:[%s2 + $0x8] sm:$0xff]
        %v387 = vld [vmem:[%s2 + $0x10] sm:$0xff]
        %v388 = vld [vmem:[%s2 + $0x18] sm:$0xff]
        %v389 = vld [vmem:[%s2 + $0x20] sm:$0xff]
        %v390 = vld [vmem:[%s2 + $0x28] sm:$0xff]
        %v391 = vld [vmem:[%s2 + $0x30] sm:$0xff]
        %v392 = vld [vmem:[%s2 + $0x38] sm:$0xff]
        %v393 = vld [vmem:[%s2 + $0x40] sm:$0xff]
        %v394 = vld [vmem:[%s2 + $0x48] sm:$0xff]
        %v395 = vld [vmem:[%s2 + $0x50] sm:$0xff]
        %v396 = vld [vmem:[%s2 + $0x58] sm:$0xff]
        %v397 = vld [vmem:[%s2 + $0x60] sm:$0xff]
        %v398 = vld [vmem:[%s2 + $0x68] sm:$0xff]
        %v399 = vld [vmem:[%s2 + $0x70] sm:$0xff]
        %v400 = vld [vmem:[%s2 + $0x78] sm:$0xff]
        %402 = vset.pattern.permute.xlu0 0
        %403 = vperm.xlu0 %402, %v385
        %v404 = vpop.permute.xlu0 %403
        %407 = vset.pattern.permute.xlu0 0
        %408 = vperm.xlu0 %407, %v386
        %v409 = vpop.permute.xlu0 %408
        %412 = vset.pattern.permute.xlu0 0
        %413 = vperm.xlu0 %412, %v387
        %v414 = vpop.permute.xlu0 %413
        %417 = vset.pattern.permute.xlu0 0
        %418 = vperm.xlu0 %417, %v388
        %v419 = vpop.permute.xlu0 %418
        %422 = vset.pattern.permute.xlu0 0
        %423 = vperm.xlu0 %422, %v389
        %v424 = vpop.permute.xlu0 %423
        %427 = vset.pattern.permute.xlu0 0
        %428 = vperm.xlu0 %427, %v390
        %v429 = vpop.permute.xlu0 %428
        %432 = vset.pattern.permute.xlu0 0
        %433 = vperm.xlu0 %432, %v391
        %v434 = vpop.permute.xlu0 %433
        %437 = vset.pattern.permute.xlu0 0
        %438 = vperm.xlu0 %437, %v392
        %v439 = vpop.permute.xlu0 %438
        %442 = vset.pattern.permute.xlu0 0
        %443 = vperm.xlu0 %442, %v393
        %v444 = vpop.permute.xlu0 %443
        %447 = vset.pattern.permute.xlu0 0
        %448 = vperm.xlu0 %447, %v394
        %v449 = vpop.permute.xlu0 %448
        %452 = vset.pattern.permute.xlu0 0
        %453 = vperm.xlu0 %452, %v395
        %v454 = vpop.permute.xlu0 %453
        %457 = vset.pattern.permute.xlu0 0
        %458 = vperm.xlu0 %457, %v396
        %v459 = vpop.permute.xlu0 %458
        %462 = vset.pattern.permute.xlu0 0
        %463 = vperm.xlu0 %462, %v397
        %v464 = vpop.permute.xlu0 %463
        %467 = vset.pattern.permute.xlu0 0
        %468 = vperm.xlu0 %467, %v398
        %v469 = vpop.permute.xlu0 %468
        %472 = vset.pattern.permute.xlu0 0
        %473 = vperm.xlu0 %472, %v399
        %v474 = vpop.permute.xlu0 %473
        %477 = vset.pattern.permute.xlu0 0
        %478 = vperm.xlu0 %477, %v400
        %v479 = vpop.permute.xlu0 %478
        %v497 = vunpack.c.l.b16 %v369
        %v498 = vunpack.c.l.b16 %v370
        %v499 = vunpack.c.l.b16 %v371
        %v500 = vunpack.c.l.b16 %v372
        %v501 = vunpack.c.l.b16 %v373
        %v502 = vunpack.c.l.b16 %v374
        %v503 = vunpack.c.l.b16 %v375
        %v504 = vunpack.c.l.b16 %v376
        %v505 = vunpack.c.l.b16 %v377
        %v506 = vunpack.c.l.b16 %v378
        %v507 = vunpack.c.l.b16 %v379
        %v508 = vunpack.c.l.b16 %v380
        %v509 = vunpack.c.l.b16 %v381
        %v510 = vunpack.c.l.b16 %v382
        %v511 = vunpack.c.l.b16 %v383
        %v512 = vunpack.c.l.b16 %v384
        %v513 = vpack.c.b16 %v498, %v497
        %v514 = vpack.c.b16 %v500, %v499
        %v515 = vpack.c.b16 %v502, %v501
        %v516 = vpack.c.b16 %v504, %v503
        %v517 = vpack.c.b16 %v506, %v505
        %v518 = vpack.c.b16 %v508, %v507
        %v519 = vpack.c.b16 %v510, %v509
        %v520 = vpack.c.b16 %v512, %v511
        %v525 = vunpack.c.l.b16 %v365
        %v526 = vunpack.c.h.b16 %v365
        %v527 = vunpack.c.l.b16 %v366
        %v528 = vunpack.c.l.b16 %v367
        %v529 = vunpack.c.h.b16 %v367
        %v530 = vunpack.c.l.b16 %v368
        %v531 = vpack.c.b16 %v528, %v525
        %v532 = vpack.c.b16 %v529, %v526
        %v533 = vpack.c.b16 %v530, %v527
        %vm534 = vcmask 97280
        %v536 = vsel %vm534, %v513, 0
        %v539 = vsel %vm534, %v514, 0
        %v542 = vsel %vm534, %v515, 0
        %v545 = vsel %vm534, %v516, 0
        %v548 = vsel %vm534, %v517, 0
        %v551 = vsel %vm534, %v518, 0
        %v554 = vsel %vm534, %v519, 0
        %v557 = vsel %vm534, %v520, 0
        %vm559 = vcmask 1045504
        %v561 = vsel %vm559, %v531, 0
        %v564 = vsel %vm559, %v532, 0
        %v567 = vsel %vm559, %v533, 0
        %569 = vmatpush.bf16.msra.mxu0 0
        %570 = vmatpush.bf16.msra.mxu0 0
        %571 = vmatpush.bf16.msra.mxu0 0
        %572 = vmatpush.bf16.msra.mxu0 0
        %573 = vmatpush.bf16.msra.mxu0 0
        %574 = vmatpush.bf16.msra.mxu0 0
        %575 = vmatpush.bf16.msra.mxu0 0
        %576 = vmatpush.bf16.msra.mxu0 %v561
        %577 = vmatmul.bf16.gmra.mxu0 %v536
        %v578 = vpop.f32.mrf.mxu0
        %v579 = vadd.f32 %v404, %v578
        %v580 = vpop.f32.mrf.mxu0
        %v581 = vadd.f32 %v409, %v580
        %582 = vmatmul.bf16.gmra.mxu0 %v539
        %v583 = vpop.f32.mrf.mxu0
        %v584 = vadd.f32 %v414, %v583
        %v585 = vpop.f32.mrf.mxu0
        %v586 = vadd.f32 %v419, %v585
        %587 = vmatmul.bf16.gmra.mxu0 %v542
        %v588 = vpop.f32.mrf.mxu0
        %v589 = vadd.f32 %v424, %v588
        %v590 = vpop.f32.mrf.mxu0
        %v591 = vadd.f32 %v429, %v590
        %592 = vmatmul.bf16.gmra.mxu0 %v545
        %v593 = vpop.f32.mrf.mxu0
        %v594 = vadd.f32 %v434, %v593
        %v595 = vpop.f32.mrf.mxu0
        %v596 = vadd.f32 %v439, %v595
        %597 = vmatmul.bf16.gmra.mxu0 %v548
        %v598 = vpop.f32.mrf.mxu0
        %v599 = vadd.f32 %v444, %v598
        %v600 = vpop.f32.mrf.mxu0
        %v601 = vadd.f32 %v449, %v600
        %602 = vmatmul.bf16.gmra.mxu0 %v551
        %v603 = vpop.f32.mrf.mxu0
        %v604 = vadd.f32 %v454, %v603
        %v605 = vpop.f32.mrf.mxu0
        %v606 = vadd.f32 %v459, %v605
        %607 = vmatmul.bf16.gmra.mxu0 %v554
        %v608 = vpop.f32.mrf.mxu0
        %v609 = vadd.f32 %v464, %v608
        %v610 = vpop.f32.mrf.mxu0
        %v611 = vadd.f32 %v469, %v610
        %612 = vmatmul.bf16.gmra.mxu0 %v557
        %v613 = vpop.f32.mrf.mxu0
        %v614 = vadd.f32 %v474, %v613
        %v615 = vpop.f32.mrf.mxu0
        %v616 = vadd.f32 %v479, %v615
        %617 = vdwg.mxu0
        %618 = vmatpush.bf16.msra.mxu0 0
        %619 = vmatpush.bf16.msra.mxu0 0
        %620 = vmatpush.bf16.msra.mxu0 0
        %621 = vmatpush.bf16.msra.mxu0 0
        %622 = vmatpush.bf16.msra.mxu0 0
        %623 = vmatpush.bf16.msra.mxu0 0
        %624 = vmatpush.bf16.msra.mxu0 0
        %625 = vmatpush.bf16.msra.mxu0 %v564
        %626 = vmatmul.bf16.gmra.mxu0 %v536
        %v627 = vpop.f32.mrf.mxu0
        %v628 = vadd.f32 %v404, %v627
        %v629 = vpop.f32.mrf.mxu0
        %v630 = vadd.f32 %v409, %v629
        %631 = vmatmul.bf16.gmra.mxu0 %v539
        %v632 = vpop.f32.mrf.mxu0
        %v633 = vadd.f32 %v414, %v632
        %v634 = vpop.f32.mrf.mxu0
        %v635 = vadd.f32 %v419, %v634
        %636 = vmatmul.bf16.gmra.mxu0 %v542
        %v637 = vpop.f32.mrf.mxu0
        %v638 = vadd.f32 %v424, %v637
        %v639 = vpop.f32.mrf.mxu0
        %v640 = vadd.f32 %v429, %v639
        %641 = vmatmul.bf16.gmra.mxu0 %v545
        %v642 = vpop.f32.mrf.mxu0
        %v643 = vadd.f32 %v434, %v642
        %v644 = vpop.f32.mrf.mxu0
        %v645 = vadd.f32 %v439, %v644
        %646 = vmatmul.bf16.gmra.mxu0 %v548
        %v647 = vpop.f32.mrf.mxu0
        %v648 = vadd.f32 %v444, %v647
        %v649 = vpop.f32.mrf.mxu0
        %v650 = vadd.f32 %v449, %v649
        %651 = vmatmul.bf16.gmra.mxu0 %v551
        %v652 = vpop.f32.mrf.mxu0
        %v653 = vadd.f32 %v454, %v652
        %v654 = vpop.f32.mrf.mxu0
        %v655 = vadd.f32 %v459, %v654
        %656 = vmatmul.bf16.gmra.mxu0 %v554
        %v657 = vpop.f32.mrf.mxu0
        %v658 = vadd.f32 %v464, %v657
        %v659 = vpop.f32.mrf.mxu0
        %v660 = vadd.f32 %v469, %v659
        %661 = vmatmul.bf16.gmra.mxu0 %v557
        %v662 = vpop.f32.mrf.mxu0
        %v663 = vadd.f32 %v474, %v662
        %v664 = vpop.f32.mrf.mxu0
        %v665 = vadd.f32 %v479, %v664
        %666 = vdwg.mxu0
        %667 = vmatpush.bf16.msra.mxu0 0
        %668 = vmatpush.bf16.msra.mxu0 0
        %669 = vmatpush.bf16.msra.mxu0 0
        %670 = vmatpush.bf16.msra.mxu0 0
        %671 = vmatpush.bf16.msra.mxu0 0
        %672 = vmatpush.bf16.msra.mxu0 0
        %673 = vmatpush.bf16.msra.mxu0 0
        %674 = vmatpush.bf16.msra.mxu0 %v567
        %675 = vmatmul.bf16.gmra.mxu0 %v536
        %v676 = vpop.f32.mrf.mxu0
        %v677 = vadd.f32 %v404, %v676
        %v678 = vpop.f32.mrf.mxu0
        %v679 = vadd.f32 %v409, %v678
        %680 = vmatmul.bf16.gmra.mxu0 %v539
        %v681 = vpop.f32.mrf.mxu0
        %v682 = vadd.f32 %v414, %v681
        %v683 = vpop.f32.mrf.mxu0
        %v684 = vadd.f32 %v419, %v683
        %685 = vmatmul.bf16.gmra.mxu0 %v542
        %v686 = vpop.f32.mrf.mxu0
        %v687 = vadd.f32 %v424, %v686
        %v688 = vpop.f32.mrf.mxu0
        %v689 = vadd.f32 %v429, %v688
        %690 = vmatmul.bf16.gmra.mxu0 %v545
        %v691 = vpop.f32.mrf.mxu0
        %v692 = vadd.f32 %v434, %v691
        %v693 = vpop.f32.mrf.mxu0
        %v694 = vadd.f32 %v439, %v693
        %695 = vmatmul.bf16.gmra.mxu0 %v548
        %v696 = vpop.f32.mrf.mxu0
        %v697 = vadd.f32 %v444, %v696
        %v698 = vpop.f32.mrf.mxu0
        %v699 = vadd.f32 %v449, %v698
        %700 = vmatmul.bf16.gmra.mxu0 %v551
        %v701 = vpop.f32.mrf.mxu0
        %v702 = vadd.f32 %v454, %v701
        %v703 = vpop.f32.mrf.mxu0
        %v704 = vadd.f32 %v459, %v703
        %705 = vmatmul.bf16.gmra.mxu0 %v554
        %v706 = vpop.f32.mrf.mxu0
        %v707 = vadd.f32 %v464, %v706
        %v708 = vpop.f32.mrf.mxu0
        %v709 = vadd.f32 %v469, %v708
        %710 = vmatmul.bf16.gmra.mxu0 %v557
        %v711 = vpop.f32.mrf.mxu0
        %v712 = vadd.f32 %v474, %v711
        %v713 = vpop.f32.mrf.mxu0
        %v714 = vadd.f32 %v479, %v713
        %715 = vdwg.mxu0
        %v716 = vmax.f32 %v579, 0.0
        %v717 = vmax.f32 %v628, 0.0
        %v718 = vmax.f32 %v677, 0.0
        %v719 = vmax.f32 %v581, 0.0
        %v720 = vmax.f32 %v630, 0.0
        %v721 = vmax.f32 %v679, 0.0
        %v722 = vmax.f32 %v584, 0.0
        %v723 = vmax.f32 %v633, 0.0
        %v724 = vmax.f32 %v682, 0.0
        %v725 = vmax.f32 %v586, 0.0
        %v726 = vmax.f32 %v635, 0.0
        %v727 = vmax.f32 %v684, 0.0
        %v728 = vmax.f32 %v589, 0.0
        %v729 = vmax.f32 %v638, 0.0
        %v730 = vmax.f32 %v687, 0.0
        %v731 = vmax.f32 %v591, 0.0
        %v732 = vmax.f32 %v640, 0.0
        %v733 = vmax.f32 %v689, 0.0
        %v734 = vmax.f32 %v594, 0.0
        %v735 = vmax.f32 %v643, 0.0
        %v736 = vmax.f32 %v692, 0.0
        %v737 = vmax.f32 %v596, 0.0
        %v738 = vmax.f32 %v645, 0.0
        %v739 = vmax.f32 %v694, 0.0
        %v740 = vmax.f32 %v599, 0.0
        %v741 = vmax.f32 %v648, 0.0
        %v742 = vmax.f32 %v697, 0.0
        %v743 = vmax.f32 %v601, 0.0
        %v744 = vmax.f32 %v650, 0.0
        %v745 = vmax.f32 %v699, 0.0
        %v746 = vmax.f32 %v604, 0.0
        %v747 = vmax.f32 %v653, 0.0
        %v748 = vmax.f32 %v702, 0.0
        %v749 = vmax.f32 %v606, 0.0
        %v750 = vmax.f32 %v655, 0.0
        %v751 = vmax.f32 %v704, 0.0
        %v752 = vmax.f32 %v609, 0.0
        %v753 = vmax.f32 %v658, 0.0
        %v754 = vmax.f32 %v707, 0.0
        %v755 = vmax.f32 %v611, 0.0
        %v756 = vmax.f32 %v660, 0.0
        %v757 = vmax.f32 %v709, 0.0
        %v758 = vmax.f32 %v614, 0.0
        %v759 = vmax.f32 %v663, 0.0
        %v760 = vmax.f32 %v712, 0.0
        %v761 = vmax.f32 %v616, 0.0
        %v762 = vmax.f32 %v665, 0.0
        %v763 = vmax.f32 %v714, 0.0
        %v764 = vpack.c.bf16 %v719, %v716
        %v765 = vpack.c.bf16 %v720, %v717
        %v766 = vpack.c.bf16 %v721, %v718
        %v767 = vpack.c.bf16 %v725, %v722
        %v768 = vpack.c.bf16 %v726, %v723
        %v769 = vpack.c.bf16 %v727, %v724
        %v770 = vpack.c.bf16 %v731, %v728
        %v771 = vpack.c.bf16 %v732, %v729
        %v772 = vpack.c.bf16 %v733, %v730
        %v773 = vpack.c.bf16 %v737, %v734
        %v774 = vpack.c.bf16 %v738, %v735
        %v775 = vpack.c.bf16 %v739, %v736
        %v776 = vpack.c.bf16 %v743, %v740
        %v777 = vpack.c.bf16 %v744, %v741
        %v778 = vpack.c.bf16 %v745, %v742
        %v779 = vpack.c.bf16 %v749, %v746
        %v780 = vpack.c.bf16 %v750, %v747
        %v781 = vpack.c.bf16 %v751, %v748
        %v782 = vpack.c.bf16 %v755, %v752
        %v783 = vpack.c.bf16 %v756, %v753
        %v784 = vpack.c.bf16 %v757, %v754
        %v785 = vpack.c.bf16 %v761, %v758
        %v786 = vpack.c.bf16 %v762, %v759
        %v787 = vpack.c.bf16 %v763, %v760
        %v788 = vld [vmem:[%s3] sm:$0xf]
        %v789 = vld [vmem:[%s3 + $0x4] sm:$0xf]
        %v790 = vld [vmem:[%s3 + $0x8] sm:$0xf]
        %v791 = vld [vmem:[%s3 + $0xc] sm:$0xf]
        %v792 = vld [vmem:[%s3 + $0x10] sm:$0xf]
        %v793 = vld [vmem:[%s3 + $0x14] sm:$0xf]
        %v794 = vld [vmem:[%s3 + $0x18] sm:$0xf]
        %v795 = vld [vmem:[%s3 + $0x1c] sm:$0xf]
        %v796 = vld [vmem:[%s3 + $0x20] sm:$0xf]
        %v797 = vld [vmem:[%s3 + $0x24] sm:$0xf]
        %v798 = vld [vmem:[%s3 + $0x28] sm:$0xf]
        %v799 = vld [vmem:[%s3 + $0x2c] sm:$0xf]
        %v800 = vld [vmem:[%s3 + $0x30] sm:$0xf]
        %v801 = vld [vmem:[%s3 + $0x34] sm:$0xf]
        %v802 = vld [vmem:[%s3 + $0x38] sm:$0xf]
        %v803 = vld [vmem:[%s3 + $0x3c] sm:$0xf]
        %v804 = vld [vmem:[%s3 + $0x40] sm:$0xf]
        %v805 = vld [vmem:[%s3 + $0x44] sm:$0xf]
        %v806 = vld [vmem:[%s3 + $0x48] sm:$0xf]
        %v807 = vld [vmem:[%s3 + $0x4c] sm:$0xf]
        %v808 = vld [vmem:[%s3 + $0x50] sm:$0xf]
        %v809 = vld [vmem:[%s3 + $0x54] sm:$0xf]
        %v810 = vld [vmem:[%s3 + $0x58] sm:$0xf]
        %v811 = vld [vmem:[%s3 + $0x5c] sm:$0xf]
        %v812 = vld [vmem:[%s3 + $0x60] sm:$0xf]
        %v813 = vld [vmem:[%s3 + $0x64] sm:$0xf]
        %v814 = vld [vmem:[%s3 + $0x68] sm:$0xf]
        %v815 = vld [vmem:[%s3 + $0x6c] sm:$0xf]
        %v816 = vld [vmem:[%s3 + $0x70] sm:$0xf]
        %v817 = vld [vmem:[%s3 + $0x74] sm:$0xf]
        %v818 = vld [vmem:[%s3 + $0x78] sm:$0xf]
        %v819 = vld [vmem:[%s3 + $0x7c] sm:$0xf]
        %v820 = vld [vmem:[%s4] sm:$0xff]
        %v821 = vld [vmem:[%s4 + $0x8] sm:$0xff]
        %v822 = vld [vmem:[%s4 + $0x10] sm:$0xff]
        %v823 = vld [vmem:[%s4 + $0x18] sm:$0xff]
        %v824 = vld [vmem:[%s4 + $0x20] sm:$0xff]
        %v825 = vld [vmem:[%s4 + $0x28] sm:$0xff]
        %v826 = vld [vmem:[%s4 + $0x30] sm:$0xff]
        %v827 = vld [vmem:[%s4 + $0x38] sm:$0xff]
        %v828 = vld [vmem:[%s4 + $0x40] sm:$0xff]
        %v829 = vld [vmem:[%s4 + $0x48] sm:$0xff]
        %v830 = vld [vmem:[%s4 + $0x50] sm:$0xff]
        %v831 = vld [vmem:[%s4 + $0x58] sm:$0xff]
        %v832 = vld [vmem:[%s4 + $0x60] sm:$0xff]
        %v833 = vld [vmem:[%s4 + $0x68] sm:$0xff]
        %v834 = vld [vmem:[%s4 + $0x70] sm:$0xff]
        %v835 = vld [vmem:[%s4 + $0x78] sm:$0xff]
        %v836 = vld [vmem:[%s4 + $0x80] sm:$0xff]
        %v837 = vld [vmem:[%s4 + $0x88] sm:$0xff]
        %v838 = vld [vmem:[%s4 + $0x90] sm:$0xff]
        %v839 = vld [vmem:[%s4 + $0x98] sm:$0xff]
        %v840 = vld [vmem:[%s4 + $0xa0] sm:$0xff]
        %v841 = vld [vmem:[%s4 + $0xa8] sm:$0xff]
        %v842 = vld [vmem:[%s4 + $0xb0] sm:$0xff]
        %v843 = vld [vmem:[%s4 + $0xb8] sm:$0xff]
        %v844 = vld [vmem:[%s4 + $0xc0] sm:$0xff]
        %v845 = vld [vmem:[%s4 + $0xc8] sm:$0xff]
        %v846 = vld [vmem:[%s4 + $0xd0] sm:$0xff]
        %v847 = vld [vmem:[%s4 + $0xd8] sm:$0xff]
        %v848 = vld [vmem:[%s4 + $0xe0] sm:$0xff]
        %v849 = vld [vmem:[%s4 + $0xe8] sm:$0xff]
        %v850 = vld [vmem:[%s4 + $0xf0] sm:$0xff]
        %v851 = vld [vmem:[%s4 + $0xf8] sm:$0xff]
        %853 = vset.pattern.permute.xlu0 0
        %854 = vperm.xlu0 %853, %v820
        %v855 = vpop.permute.xlu0 %854
        %858 = vset.pattern.permute.xlu0 0
        %859 = vperm.xlu0 %858, %v821
        %v860 = vpop.permute.xlu0 %859
        %863 = vset.pattern.permute.xlu0 0
        %864 = vperm.xlu0 %863, %v822
        %v865 = vpop.permute.xlu0 %864
        %868 = vset.pattern.permute.xlu0 0
        %869 = vperm.xlu0 %868, %v823
        %v870 = vpop.permute.xlu0 %869
        %873 = vset.pattern.permute.xlu0 0
        %874 = vperm.xlu0 %873, %v824
        %v875 = vpop.permute.xlu0 %874
        %878 = vset.pattern.permute.xlu0 0
        %879 = vperm.xlu0 %878, %v825
        %v880 = vpop.permute.xlu0 %879
        %883 = vset.pattern.permute.xlu0 0
        %884 = vperm.xlu0 %883, %v826
        %v885 = vpop.permute.xlu0 %884
        %888 = vset.pattern.permute.xlu0 0
        %889 = vperm.xlu0 %888, %v827
        %v890 = vpop.permute.xlu0 %889
        %893 = vset.pattern.permute.xlu0 0
        %894 = vperm.xlu0 %893, %v828
        %v895 = vpop.permute.xlu0 %894
        %898 = vset.pattern.permute.xlu0 0
        %899 = vperm.xlu0 %898, %v829
        %v900 = vpop.permute.xlu0 %899
        %903 = vset.pattern.permute.xlu0 0
        %904 = vperm.xlu0 %903, %v830
        %v905 = vpop.permute.xlu0 %904
        %908 = vset.pattern.permute.xlu0 0
        %909 = vperm.xlu0 %908, %v831
        %v910 = vpop.permute.xlu0 %909
        %913 = vset.pattern.permute.xlu0 0
        %914 = vperm.xlu0 %913, %v832
        %v915 = vpop.permute.xlu0 %914
        %918 = vset.pattern.permute.xlu0 0
        %919 = vperm.xlu0 %918, %v833
        %v920 = vpop.permute.xlu0 %919
        %923 = vset.pattern.permute.xlu0 0
        %924 = vperm.xlu0 %923, %v834
        %v925 = vpop.permute.xlu0 %924
        %928 = vset.pattern.permute.xlu0 0
        %929 = vperm.xlu0 %928, %v835
        %v930 = vpop.permute.xlu0 %929
        %933 = vset.pattern.permute.xlu0 0
        %934 = vperm.xlu0 %933, %v836
        %v935 = vpop.permute.xlu0 %934
        %938 = vset.pattern.permute.xlu0 0
        %939 = vperm.xlu0 %938, %v837
        %v940 = vpop.permute.xlu0 %939
        %943 = vset.pattern.permute.xlu0 0
        %944 = vperm.xlu0 %943, %v838
        %v945 = vpop.permute.xlu0 %944
        %948 = vset.pattern.permute.xlu0 0
        %949 = vperm.xlu0 %948, %v839
        %v950 = vpop.permute.xlu0 %949
        %953 = vset.pattern.permute.xlu0 0
        %954 = vperm.xlu0 %953, %v840
        %v955 = vpop.permute.xlu0 %954
        %958 = vset.pattern.permute.xlu0 0
        %959 = vperm.xlu0 %958, %v841
        %v960 = vpop.permute.xlu0 %959
        %963 = vset.pattern.permute.xlu0 0
        %964 = vperm.xlu0 %963, %v842
        %v965 = vpop.permute.xlu0 %964
        %968 = vset.pattern.permute.xlu0 0
        %969 = vperm.xlu0 %968, %v843
        %v970 = vpop.permute.xlu0 %969
        %973 = vset.pattern.permute.xlu0 0
        %974 = vperm.xlu0 %973, %v844
        %v975 = vpop.permute.xlu0 %974
        %978 = vset.pattern.permute.xlu0 0
        %979 = vperm.xlu0 %978, %v845
        %v980 = vpop.permute.xlu0 %979
        %983 = vset.pattern.permute.xlu0 0
        %984 = vperm.xlu0 %983, %v846
        %v985 = vpop.permute.xlu0 %984
        %988 = vset.pattern.permute.xlu0 0
        %989 = vperm.xlu0 %988, %v847
        %v990 = vpop.permute.xlu0 %989
        %993 = vset.pattern.permute.xlu0 0
        %994 = vperm.xlu0 %993, %v848
        %v995 = vpop.permute.xlu0 %994
        %998 = vset.pattern.permute.xlu0 0
        %999 = vperm.xlu0 %998, %v849
        %v1000 = vpop.permute.xlu0 %999
        %1003 = vset.pattern.permute.xlu0 0
        %1004 = vperm.xlu0 %1003, %v850
        %v1005 = vpop.permute.xlu0 %1004
        %1008 = vset.pattern.permute.xlu0 0
        %1009 = vperm.xlu0 %1008, %v851
        %v1010 = vpop.permute.xlu0 %1009
        %v1044 = vunpack.c.l.b16 %v788
        %v1045 = vunpack.c.l.b16 %v789
        %v1046 = vunpack.c.l.b16 %v790
        %v1047 = vunpack.c.l.b16 %v791
        %v1048 = vunpack.c.l.b16 %v792
        %v1049 = vunpack.c.l.b16 %v793
        %v1050 = vunpack.c.l.b16 %v794
        %v1051 = vunpack.c.l.b16 %v795
        %v1052 = vunpack.c.l.b16 %v796
        %v1053 = vunpack.c.l.b16 %v797
        %v1054 = vunpack.c.l.b16 %v798
        %v1055 = vunpack.c.l.b16 %v799
        %v1056 = vunpack.c.l.b16 %v800
        %v1057 = vunpack.c.l.b16 %v801
        %v1058 = vunpack.c.l.b16 %v802
        %v1059 = vunpack.c.l.b16 %v803
        %v1060 = vunpack.c.l.b16 %v804
        %v1061 = vunpack.c.l.b16 %v805
        %v1062 = vunpack.c.l.b16 %v806
        %v1063 = vunpack.c.l.b16 %v807
        %v1064 = vunpack.c.l.b16 %v808
        %v1065 = vunpack.c.l.b16 %v809
        %v1066 = vunpack.c.l.b16 %v810
        %v1067 = vunpack.c.l.b16 %v811
        %v1068 = vunpack.c.l.b16 %v812
        %v1069 = vunpack.c.l.b16 %v813
        %v1070 = vunpack.c.l.b16 %v814
        %v1071 = vunpack.c.l.b16 %v815
        %v1072 = vunpack.c.l.b16 %v816
        %v1073 = vunpack.c.l.b16 %v817
        %v1074 = vunpack.c.l.b16 %v818
        %v1075 = vunpack.c.l.b16 %v819
        %v1076 = vpack.c.b16 %v1045, %v1044
        %v1077 = vpack.c.b16 %v1047, %v1046
        %v1078 = vpack.c.b16 %v1049, %v1048
        %v1079 = vpack.c.b16 %v1051, %v1050
        %v1080 = vpack.c.b16 %v1053, %v1052
        %v1081 = vpack.c.b16 %v1055, %v1054
        %v1082 = vpack.c.b16 %v1057, %v1056
        %v1083 = vpack.c.b16 %v1059, %v1058
        %v1084 = vpack.c.b16 %v1061, %v1060
        %v1085 = vpack.c.b16 %v1063, %v1062
        %v1086 = vpack.c.b16 %v1065, %v1064
        %v1087 = vpack.c.b16 %v1067, %v1066
        %v1088 = vpack.c.b16 %v1069, %v1068
        %v1089 = vpack.c.b16 %v1071, %v1070
        %v1090 = vpack.c.b16 %v1073, %v1072
        %v1091 = vpack.c.b16 %v1075, %v1074
        %1108 = vmatpush.bf16.msra.mxu0 %v785
        %1109 = vmatpush.bf16.msra.mxu0 %v782
        %1110 = vmatpush.bf16.msra.mxu0 %v779
        %1111 = vmatpush.bf16.msra.mxu0 %v776
        %1112 = vmatpush.bf16.msra.mxu0 %v773
        %1113 = vmatpush.bf16.msra.mxu0 %v770
        %1114 = vmatpush.bf16.msra.mxu0 %v767
        %1115 = vmatpush.bf16.msra.mxu0 %v764
        %1116 = vmatmul.bf16.gmra.mxu0 %v1076
        %v1117 = vpop.f32.mrf.mxu0
        %v1118 = vadd.f32 %v855, %v1117
        %v1119 = vpop.f32.mrf.mxu0
        %v1120 = vadd.f32 %v860, %v1119
        %1121 = vmatmul.bf16.gmra.mxu0 %v1077
        %v1122 = vpop.f32.mrf.mxu0
        %v1123 = vadd.f32 %v865, %v1122
        %v1124 = vpop.f32.mrf.mxu0
        %v1125 = vadd.f32 %v870, %v1124
        %1126 = vmatmul.bf16.gmra.mxu0 %v1078
        %v1127 = vpop.f32.mrf.mxu0
        %v1128 = vadd.f32 %v875, %v1127
        %v1129 = vpop.f32.mrf.mxu0
        %v1130 = vadd.f32 %v880, %v1129
        %1131 = vmatmul.bf16.gmra.mxu0 %v1079
        %v1132 = vpop.f32.mrf.mxu0
        %v1133 = vadd.f32 %v885, %v1132
        %v1134 = vpop.f32.mrf.mxu0
        %v1135 = vadd.f32 %v890, %v1134
        %1136 = vmatmul.bf16.gmra.mxu0 %v1080
        %v1137 = vpop.f32.mrf.mxu0
        %v1138 = vadd.f32 %v895, %v1137
        %v1139 = vpop.f32.mrf.mxu0
        %v1140 = vadd.f32 %v900, %v1139
        %1141 = vmatmul.bf16.gmra.mxu0 %v1081
        %v1142 = vpop.f32.mrf.mxu0
        %v1143 = vadd.f32 %v905, %v1142
        %v1144 = vpop.f32.mrf.mxu0
        %v1145 = vadd.f32 %v910, %v1144
        %1146 = vmatmul.bf16.gmra.mxu0 %v1082
        %v1147 = vpop.f32.mrf.mxu0
        %v1148 = vadd.f32 %v915, %v1147
        %v1149 = vpop.f32.mrf.mxu0
        %v1150 = vadd.f32 %v920, %v1149
        %1151 = vmatmul.bf16.gmra.mxu0 %v1083
        %v1152 = vpop.f32.mrf.mxu0
        %v1153 = vadd.f32 %v925, %v1152
        %v1154 = vpop.f32.mrf.mxu0
        %v1155 = vadd.f32 %v930, %v1154
        %1156 = vmatmul.bf16.gmra.mxu0 %v1084
        %v1157 = vpop.f32.mrf.mxu0
        %v1158 = vadd.f32 %v935, %v1157
        %v1159 = vpop.f32.mrf.mxu0
        %v1160 = vadd.f32 %v940, %v1159
        %1161 = vmatmul.bf16.gmra.mxu0 %v1085
        %v1162 = vpop.f32.mrf.mxu0
        %v1163 = vadd.f32 %v945, %v1162
        %v1164 = vpop.f32.mrf.mxu0
        %v1165 = vadd.f32 %v950, %v1164
        %1166 = vmatmul.bf16.gmra.mxu0 %v1086
        %v1167 = vpop.f32.mrf.mxu0
        %v1168 = vadd.f32 %v955, %v1167
        %v1169 = vpop.f32.mrf.mxu0
        %v1170 = vadd.f32 %v960, %v1169
        %1171 = vmatmul.bf16.gmra.mxu0 %v1087
        %v1172 = vpop.f32.mrf.mxu0
        %v1173 = vadd.f32 %v965, %v1172
        %v1174 = vpop.f32.mrf.mxu0
        %v1175 = vadd.f32 %v970, %v1174
        %1176 = vmatmul.bf16.gmra.mxu0 %v1088
        %v1177 = vpop.f32.mrf.mxu0
        %v1178 = vadd.f32 %v975, %v1177
        %v1179 = vpop.f32.mrf.mxu0
        %v1180 = vadd.f32 %v980, %v1179
        %1181 = vmatmul.bf16.gmra.mxu0 %v1089
        %v1182 = vpop.f32.mrf.mxu0
        %v1183 = vadd.f32 %v985, %v1182
        %v1184 = vpop.f32.mrf.mxu0
        %v1185 = vadd.f32 %v990, %v1184
        %1186 = vmatmul.bf16.gmra.mxu0 %v1090
        %v1187 = vpop.f32.mrf.mxu0
        %v1188 = vadd.f32 %v995, %v1187
        %v1189 = vpop.f32.mrf.mxu0
        %v1190 = vadd.f32 %v1000, %v1189
        %1191 = vmatmul.bf16.gmra.mxu0 %v1091
        %v1192 = vpop.f32.mrf.mxu0
        %v1193 = vadd.f32 %v1005, %v1192
        %v1194 = vpop.f32.mrf.mxu0
        %v1195 = vadd.f32 %v1010, %v1194
        %1196 = vdwg.mxu0
        %1197 = vmatpush.bf16.msra.mxu0 %v786
        %1198 = vmatpush.bf16.msra.mxu0 %v783
        %1199 = vmatpush.bf16.msra.mxu0 %v780
        %1200 = vmatpush.bf16.msra.mxu0 %v777
        %1201 = vmatpush.bf16.msra.mxu0 %v774
        %1202 = vmatpush.bf16.msra.mxu0 %v771
        %1203 = vmatpush.bf16.msra.mxu0 %v768
        %1204 = vmatpush.bf16.msra.mxu0 %v765
        %1205 = vmatmul.bf16.gmra.mxu0 %v1076
        %v1206 = vpop.f32.mrf.mxu0
        %v1207 = vadd.f32 %v855, %v1206
        %v1208 = vpop.f32.mrf.mxu0
        %v1209 = vadd.f32 %v860, %v1208
        %1210 = vmatmul.bf16.gmra.mxu0 %v1077
        %v1211 = vpop.f32.mrf.mxu0
        %v1212 = vadd.f32 %v865, %v1211
        %v1213 = vpop.f32.mrf.mxu0
        %v1214 = vadd.f32 %v870, %v1213
        %1215 = vmatmul.bf16.gmra.mxu0 %v1078
        %v1216 = vpop.f32.mrf.mxu0
        %v1217 = vadd.f32 %v875, %v1216
        %v1218 = vpop.f32.mrf.mxu0
        %v1219 = vadd.f32 %v880, %v1218
        %1220 = vmatmul.bf16.gmra.mxu0 %v1079
        %v1221 = vpop.f32.mrf.mxu0
        %v1222 = vadd.f32 %v885, %v1221
        %v1223 = vpop.f32.mrf.mxu0
        %v1224 = vadd.f32 %v890, %v1223
        %1225 = vmatmul.bf16.gmra.mxu0 %v1080
        %v1226 = vpop.f32.mrf.mxu0
        %v1227 = vadd.f32 %v895, %v1226
        %v1228 = vpop.f32.mrf.mxu0
        %v1229 = vadd.f32 %v900, %v1228
        %1230 = vmatmul.bf16.gmra.mxu0 %v1081
        %v1231 = vpop.f32.mrf.mxu0
        %v1232 = vadd.f32 %v905, %v1231
        %v1233 = vpop.f32.mrf.mxu0
        %v1234 = vadd.f32 %v910, %v1233
        %1235 = vmatmul.bf16.gmra.mxu0 %v1082
        %v1236 = vpop.f32.mrf.mxu0
        %v1237 = vadd.f32 %v915, %v1236
        %v1238 = vpop.f32.mrf.mxu0
        %v1239 = vadd.f32 %v920, %v1238
        %1240 = vmatmul.bf16.gmra.mxu0 %v1083
        %v1241 = vpop.f32.mrf.mxu0
        %v1242 = vadd.f32 %v925, %v1241
        %v1243 = vpop.f32.mrf.mxu0
        %v1244 = vadd.f32 %v930, %v1243
        %1245 = vmatmul.bf16.gmra.mxu0 %v1084
        %v1246 = vpop.f32.mrf.mxu0
        %v1247 = vadd.f32 %v935, %v1246
        %v1248 = vpop.f32.mrf.mxu0
        %v1249 = vadd.f32 %v940, %v1248
        %1250 = vmatmul.bf16.gmra.mxu0 %v1085
        %v1251 = vpop.f32.mrf.mxu0
        %v1252 = vadd.f32 %v945, %v1251
        %v1253 = vpop.f32.mrf.mxu0
        %v1254 = vadd.f32 %v950, %v1253
        %1255 = vmatmul.bf16.gmra.mxu0 %v1086
        %v1256 = vpop.f32.mrf.mxu0
        %v1257 = vadd.f32 %v955, %v1256
        %v1258 = vpop.f32.mrf.mxu0
        %v1259 = vadd.f32 %v960, %v1258
        %1260 = vmatmul.bf16.gmra.mxu0 %v1087
        %v1261 = vpop.f32.mrf.mxu0
        %v1262 = vadd.f32 %v965, %v1261
        %v1263 = vpop.f32.mrf.mxu0
        %v1264 = vadd.f32 %v970, %v1263
        %1265 = vmatmul.bf16.gmra.mxu0 %v1088
        %v1266 = vpop.f32.mrf.mxu0
        %v1267 = vadd.f32 %v975, %v1266
        %v1268 = vpop.f32.mrf.mxu0
        %v1269 = vadd.f32 %v980, %v1268
        %1270 = vmatmul.bf16.gmra.mxu0 %v1089
        %v1271 = vpop.f32.mrf.mxu0
        %v1272 = vadd.f32 %v985, %v1271
        %v1273 = vpop.f32.mrf.mxu0
        %v1274 = vadd.f32 %v990, %v1273
        %1275 = vmatmul.bf16.gmra.mxu0 %v1090
        %v1276 = vpop.f32.mrf.mxu0
        %v1277 = vadd.f32 %v995, %v1276
        %v1278 = vpop.f32.mrf.mxu0
        %v1279 = vadd.f32 %v1000, %v1278
        %1280 = vmatmul.bf16.gmra.mxu0 %v1091
        %v1281 = vpop.f32.mrf.mxu0
        %v1282 = vadd.f32 %v1005, %v1281
        %v1283 = vpop.f32.mrf.mxu0
        %v1284 = vadd.f32 %v1010, %v1283
        %1285 = vdwg.mxu0
        %1286 = vmatpush.bf16.msra.mxu0 %v787
        %1287 = vmatpush.bf16.msra.mxu0 %v784
        %1288 = vmatpush.bf16.msra.mxu0 %v781
        %1289 = vmatpush.bf16.msra.mxu0 %v778
        %1290 = vmatpush.bf16.msra.mxu0 %v775
        %1291 = vmatpush.bf16.msra.mxu0 %v772
        %1292 = vmatpush.bf16.msra.mxu0 %v769
        %1293 = vmatpush.bf16.msra.mxu0 %v766
        %1294 = vmatmul.bf16.gmra.mxu0 %v1076
        %v1295 = vpop.f32.mrf.mxu0
        %v1296 = vadd.f32 %v855, %v1295
        %v1297 = vpop.f32.mrf.mxu0
        %v1298 = vadd.f32 %v860, %v1297
        %1299 = vmatmul.bf16.gmra.mxu0 %v1077
        %v1300 = vpop.f32.mrf.mxu0
        %v1301 = vadd.f32 %v865, %v1300
        %v1302 = vpop.f32.mrf.mxu0
        %v1303 = vadd.f32 %v870, %v1302
        %1304 = vmatmul.bf16.gmra.mxu0 %v1078
        %v1305 = vpop.f32.mrf.mxu0
        %v1306 = vadd.f32 %v875, %v1305
        %v1307 = vpop.f32.mrf.mxu0
        %v1308 = vadd.f32 %v880, %v1307
        %1309 = vmatmul.bf16.gmra.mxu0 %v1079
        %v1310 = vpop.f32.mrf.mxu0
        %v1311 = vadd.f32 %v885, %v1310
        %v1312 = vpop.f32.mrf.mxu0
        %v1313 = vadd.f32 %v890, %v1312
        %1314 = vmatmul.bf16.gmra.mxu0 %v1080
        %v1315 = vpop.f32.mrf.mxu0
        %v1316 = vadd.f32 %v895, %v1315
        %v1317 = vpop.f32.mrf.mxu0
        %v1318 = vadd.f32 %v900, %v1317
        %1319 = vmatmul.bf16.gmra.mxu0 %v1081
        %v1320 = vpop.f32.mrf.mxu0
        %v1321 = vadd.f32 %v905, %v1320
        %v1322 = vpop.f32.mrf.mxu0
        %v1323 = vadd.f32 %v910, %v1322
        %1324 = vmatmul.bf16.gmra.mxu0 %v1082
        %v1325 = vpop.f32.mrf.mxu0
        %v1326 = vadd.f32 %v915, %v1325
        %v1327 = vpop.f32.mrf.mxu0
        %v1328 = vadd.f32 %v920, %v1327
        %1329 = vmatmul.bf16.gmra.mxu0 %v1083
        %v1330 = vpop.f32.mrf.mxu0
        %v1331 = vadd.f32 %v925, %v1330
        %v1332 = vpop.f32.mrf.mxu0
        %v1333 = vadd.f32 %v930, %v1332
        %1334 = vmatmul.bf16.gmra.mxu0 %v1084
        %v1335 = vpop.f32.mrf.mxu0
        %v1336 = vadd.f32 %v935, %v1335
        %v1337 = vpop.f32.mrf.mxu0
        %v1338 = vadd.f32 %v940, %v1337
        %1339 = vmatmul.bf16.gmra.mxu0 %v1085
        %v1340 = vpop.f32.mrf.mxu0
        %v1341 = vadd.f32 %v945, %v1340
        %v1342 = vpop.f32.mrf.mxu0
        %v1343 = vadd.f32 %v950, %v1342
        %1344 = vmatmul.bf16.gmra.mxu0 %v1086
        %v1345 = vpop.f32.mrf.mxu0
        %v1346 = vadd.f32 %v955, %v1345
        %v1347 = vpop.f32.mrf.mxu0
        %v1348 = vadd.f32 %v960, %v1347
        %1349 = vmatmul.bf16.gmra.mxu0 %v1087
        %v1350 = vpop.f32.mrf.mxu0
        %v1351 = vadd.f32 %v965, %v1350
        %v1352 = vpop.f32.mrf.mxu0
        %v1353 = vadd.f32 %v970, %v1352
        %1354 = vmatmul.bf16.gmra.mxu0 %v1088
        %v1355 = vpop.f32.mrf.mxu0
        %v1356 = vadd.f32 %v975, %v1355
        %v1357 = vpop.f32.mrf.mxu0
        %v1358 = vadd.f32 %v980, %v1357
        %1359 = vmatmul.bf16.gmra.mxu0 %v1089
        %v1360 = vpop.f32.mrf.mxu0
        %v1361 = vadd.f32 %v985, %v1360
        %v1362 = vpop.f32.mrf.mxu0
        %v1363 = vadd.f32 %v990, %v1362
        %1364 = vmatmul.bf16.gmra.mxu0 %v1090
        %v1365 = vpop.f32.mrf.mxu0
        %v1366 = vadd.f32 %v995, %v1365
        %v1367 = vpop.f32.mrf.mxu0
        %v1368 = vadd.f32 %v1000, %v1367
        %1369 = vmatmul.bf16.gmra.mxu0 %v1091
        %v1370 = vpop.f32.mrf.mxu0
        %v1371 = vadd.f32 %v1005, %v1370
        %v1372 = vpop.f32.mrf.mxu0
        %v1373 = vadd.f32 %v1010, %v1372
        %1374 = vdwg.mxu0
        %v1375 = vmax.f32 %v1118, 0.0
        %v1376 = vmax.f32 %v1207, 0.0
        %v1377 = vmax.f32 %v1296, 0.0
        %v1378 = vmax.f32 %v1120, 0.0
        %v1379 = vmax.f32 %v1209, 0.0
        %v1380 = vmax.f32 %v1298, 0.0
        %v1381 = vmax.f32 %v1123, 0.0
        %v1382 = vmax.f32 %v1212, 0.0
        %v1383 = vmax.f32 %v1301, 0.0
        %v1384 = vmax.f32 %v1125, 0.0
        %v1385 = vmax.f32 %v1214, 0.0
        %v1386 = vmax.f32 %v1303, 0.0
        %v1387 = vmax.f32 %v1128, 0.0
        %v1388 = vmax.f32 %v1217, 0.0
        %v1389 = vmax.f32 %v1306, 0.0
        %v1390 = vmax.f32 %v1130, 0.0
        %v1391 = vmax.f32 %v1219, 0.0
        %v1392 = vmax.f32 %v1308, 0.0
        %v1393 = vmax.f32 %v1133, 0.0
        %v1394 = vmax.f32 %v1222, 0.0
        %v1395 = vmax.f32 %v1311, 0.0
        %v1396 = vmax.f32 %v1135, 0.0
        %v1397 = vmax.f32 %v1224, 0.0
        %v1398 = vmax.f32 %v1313, 0.0
        %v1399 = vmax.f32 %v1138, 0.0
        %v1400 = vmax.f32 %v1227, 0.0
        %v1401 = vmax.f32 %v1316, 0.0
        %v1402 = vmax.f32 %v1140, 0.0
        %v1403 = vmax.f32 %v1229, 0.0
        %v1404 = vmax.f32 %v1318, 0.0
        %v1405 = vmax.f32 %v1143, 0.0
        %v1406 = vmax.f32 %v1232, 0.0
        %v1407 = vmax.f32 %v1321, 0.0
        %v1408 = vmax.f32 %v1145, 0.0
        %v1409 = vmax.f32 %v1234, 0.0
        %v1410 = vmax.f32 %v1323, 0.0
        %v1411 = vmax.f32 %v1148, 0.0
        %v1412 = vmax.f32 %v1237, 0.0
        %v1413 = vmax.f32 %v1326, 0.0
        %v1414 = vmax.f32 %v1150, 0.0
        %v1415 = vmax.f32 %v1239, 0.0
        %v1416 = vmax.f32 %v1328, 0.0
        %v1417 = vmax.f32 %v1153, 0.0
        %v1418 = vmax.f32 %v1242, 0.0
        %v1419 = vmax.f32 %v1331, 0.0
        %v1420 = vmax.f32 %v1155, 0.0
        %v1421 = vmax.f32 %v1244, 0.0
        %v1422 = vmax.f32 %v1333, 0.0
        %v1423 = vmax.f32 %v1158, 0.0
        %v1424 = vmax.f32 %v1247, 0.0
        %v1425 = vmax.f32 %v1336, 0.0
        %v1426 = vmax.f32 %v1160, 0.0
        %v1427 = vmax.f32 %v1249, 0.0
        %v1428 = vmax.f32 %v1338, 0.0
        %v1429 = vmax.f32 %v1163, 0.0
        %v1430 = vmax.f32 %v1252, 0.0
        %v1431 = vmax.f32 %v1341, 0.0
        %v1432 = vmax.f32 %v1165, 0.0
        %v1433 = vmax.f32 %v1254, 0.0
        %v1434 = vmax.f32 %v1343, 0.0
        %v1435 = vmax.f32 %v1168, 0.0
        %v1436 = vmax.f32 %v1257, 0.0
        %v1437 = vmax.f32 %v1346, 0.0
        %v1438 = vmax.f32 %v1170, 0.0
        %v1439 = vmax.f32 %v1259, 0.0
        %v1440 = vmax.f32 %v1348, 0.0
        %v1441 = vmax.f32 %v1173, 0.0
        %v1442 = vmax.f32 %v1262, 0.0
        %v1443 = vmax.f32 %v1351, 0.0
        %v1444 = vmax.f32 %v1175, 0.0
        %v1445 = vmax.f32 %v1264, 0.0
        %v1446 = vmax.f32 %v1353, 0.0
        %v1447 = vmax.f32 %v1178, 0.0
        %v1448 = vmax.f32 %v1267, 0.0
        %v1449 = vmax.f32 %v1356, 0.0
        %v1450 = vmax.f32 %v1180, 0.0
        %v1451 = vmax.f32 %v1269, 0.0
        %v1452 = vmax.f32 %v1358, 0.0
        %v1453 = vmax.f32 %v1183, 0.0
        %v1454 = vmax.f32 %v1272, 0.0
        %v1455 = vmax.f32 %v1361, 0.0
        %v1456 = vmax.f32 %v1185, 0.0
        %v1457 = vmax.f32 %v1274, 0.0
        %v1458 = vmax.f32 %v1363, 0.0
        %v1459 = vmax.f32 %v1188, 0.0
        %v1460 = vmax.f32 %v1277, 0.0
        %v1461 = vmax.f32 %v1366, 0.0
        %v1462 = vmax.f32 %v1190, 0.0
        %v1463 = vmax.f32 %v1279, 0.0
        %v1464 = vmax.f32 %v1368, 0.0
        %v1465 = vmax.f32 %v1193, 0.0
        %v1466 = vmax.f32 %v1282, 0.0
        %v1467 = vmax.f32 %v1371, 0.0
        %v1468 = vmax.f32 %v1195, 0.0
        %v1469 = vmax.f32 %v1284, 0.0
        %v1470 = vmax.f32 %v1373, 0.0
        %v1471 = vpack.c.bf16 %v1378, %v1375
        %v1472 = vpack.c.bf16 %v1379, %v1376
        %v1473 = vpack.c.bf16 %v1380, %v1377
        %v1474 = vpack.c.bf16 %v1384, %v1381
        %v1475 = vpack.c.bf16 %v1385, %v1382
        %v1476 = vpack.c.bf16 %v1386, %v1383
        %v1477 = vpack.c.bf16 %v1390, %v1387
        %v1478 = vpack.c.bf16 %v1391, %v1388
        %v1479 = vpack.c.bf16 %v1392, %v1389
        %v1480 = vpack.c.bf16 %v1396, %v1393
        %v1481 = vpack.c.bf16 %v1397, %v1394
        %v1482 = vpack.c.bf16 %v1398, %v1395
        %v1483 = vpack.c.bf16 %v1402, %v1399
        %v1484 = vpack.c.bf16 %v1403, %v1400
        %v1485 = vpack.c.bf16 %v1404, %v1401
        %v1486 = vpack.c.bf16 %v1408, %v1405
        %v1487 = vpack.c.bf16 %v1409, %v1406
        %v1488 = vpack.c.bf16 %v1410, %v1407
        %v1489 = vpack.c.bf16 %v1414, %v1411
        %v1490 = vpack.c.bf16 %v1415, %v1412
        %v1491 = vpack.c.bf16 %v1416, %v1413
        %v1492 = vpack.c.bf16 %v1420, %v1417
        %v1493 = vpack.c.bf16 %v1421, %v1418
        %v1494 = vpack.c.bf16 %v1422, %v1419
        %v1495 = vpack.c.bf16 %v1426, %v1423
        %v1496 = vpack.c.bf16 %v1427, %v1424
        %v1497 = vpack.c.bf16 %v1428, %v1425
        %v1498 = vpack.c.bf16 %v1432, %v1429
        %v1499 = vpack.c.bf16 %v1433, %v1430
        %v1500 = vpack.c.bf16 %v1434, %v1431
        %v1501 = vpack.c.bf16 %v1438, %v1435
        %v1502 = vpack.c.bf16 %v1439, %v1436
        %v1503 = vpack.c.bf16 %v1440, %v1437
        %v1504 = vpack.c.bf16 %v1444, %v1441
        %v1505 = vpack.c.bf16 %v1445, %v1442
        %v1506 = vpack.c.bf16 %v1446, %v1443
        %v1507 = vpack.c.bf16 %v1450, %v1447
        %v1508 = vpack.c.bf16 %v1451, %v1448
        %v1509 = vpack.c.bf16 %v1452, %v1449
        %v1510 = vpack.c.bf16 %v1456, %v1453
        %v1511 = vpack.c.bf16 %v1457, %v1454
        %v1512 = vpack.c.bf16 %v1458, %v1455
        %v1513 = vpack.c.bf16 %v1462, %v1459
        %v1514 = vpack.c.bf16 %v1463, %v1460
        %v1515 = vpack.c.bf16 %v1464, %v1461
        %v1516 = vpack.c.bf16 %v1468, %v1465
        %v1517 = vpack.c.bf16 %v1469, %v1466
        %v1518 = vpack.c.bf16 %v1470, %v1467
        %v1519 = vld [vmem:[%s5] sm:$0xff]
        %v1520 = vld [vmem:[%s5 + $0x8] sm:$0xff]
        %v1521 = vld [vmem:[%s5 + $0x10] sm:$0xff]
        %v1522 = vld [vmem:[%s5 + $0x18] sm:$0xff]
        %v1523 = vld [vmem:[%s5 + $0x20] sm:$0xff]
        %v1524 = vld [vmem:[%s5 + $0x28] sm:$0xff]
        %v1525 = vld [vmem:[%s5 + $0x30] sm:$0xff]
        %v1526 = vld [vmem:[%s5 + $0x38] sm:$0xff]
        %v1527 = vld [vmem:[%s5 + $0x40] sm:$0xff]
        %v1528 = vld [vmem:[%s5 + $0x48] sm:$0xff]
        %v1529 = vld [vmem:[%s5 + $0x50] sm:$0xff]
        %v1530 = vld [vmem:[%s5 + $0x58] sm:$0xff]
        %v1531 = vld [vmem:[%s5 + $0x60] sm:$0xff]
        %v1532 = vld [vmem:[%s5 + $0x68] sm:$0xff]
        %v1533 = vld [vmem:[%s5 + $0x70] sm:$0xff]
        %v1534 = vld [vmem:[%s5 + $0x78] sm:$0xff]
        %v1535 = vld [vmem:[%s5 + $0x80] sm:$0xff]
        %v1536 = vld [vmem:[%s5 + $0x88] sm:$0xff]
        %v1537 = vld [vmem:[%s5 + $0x90] sm:$0xff]
        %v1538 = vld [vmem:[%s5 + $0x98] sm:$0xff]
        %v1539 = vld [vmem:[%s5 + $0xa0] sm:$0xff]
        %v1540 = vld [vmem:[%s5 + $0xa8] sm:$0xff]
        %v1541 = vld [vmem:[%s5 + $0xb0] sm:$0xff]
        %v1542 = vld [vmem:[%s5 + $0xb8] sm:$0xff]
        %v1543 = vld [vmem:[%s5 + $0xc0] sm:$0xff]
        %v1544 = vld [vmem:[%s5 + $0xc8] sm:$0xff]
        %v1545 = vld [vmem:[%s5 + $0xd0] sm:$0xff]
        %v1546 = vld [vmem:[%s5 + $0xd8] sm:$0xff]
        %v1547 = vld [vmem:[%s5 + $0xe0] sm:$0xff]
        %v1548 = vld [vmem:[%s5 + $0xe8] sm:$0xff]
        %v1549 = vld [vmem:[%s5 + $0xf0] sm:$0xff]
        %v1550 = vld [vmem:[%s5 + $0xf8] sm:$0xff]
        %v1551 = vld [vmem:[%s6] sm:$0xff]
        %v1552 = vld [vmem:[%s6 + $0x8] sm:$0xff]
        %v1553 = vld [vmem:[%s6 + $0x10] sm:$0xff]
        %v1554 = vld [vmem:[%s6 + $0x18] sm:$0xff]
        %v1555 = vld [vmem:[%s6 + $0x20] sm:$0xff]
        %v1556 = vld [vmem:[%s6 + $0x28] sm:$0xff]
        %v1557 = vld [vmem:[%s6 + $0x30] sm:$0xff]
        %v1558 = vld [vmem:[%s6 + $0x38] sm:$0xff]
        %v1559 = vld [vmem:[%s6 + $0x40] sm:$0xff]
        %v1560 = vld [vmem:[%s6 + $0x48] sm:$0xff]
        %v1561 = vld [vmem:[%s6 + $0x50] sm:$0xff]
        %v1562 = vld [vmem:[%s6 + $0x58] sm:$0xff]
        %v1563 = vld [vmem:[%s6 + $0x60] sm:$0xff]
        %v1564 = vld [vmem:[%s6 + $0x68] sm:$0xff]
        %v1565 = vld [vmem:[%s6 + $0x70] sm:$0xff]
        %v1566 = vld [vmem:[%s6 + $0x78] sm:$0xff]
        %v1567 = vld [vmem:[%s6 + $0x80] sm:$0xff]
        %v1568 = vld [vmem:[%s6 + $0x88] sm:$0xff]
        %v1569 = vld [vmem:[%s6 + $0x90] sm:$0xff]
        %v1570 = vld [vmem:[%s6 + $0x98] sm:$0xff]
        %v1571 = vld [vmem:[%s6 + $0xa0] sm:$0xff]
        %v1572 = vld [vmem:[%s6 + $0xa8] sm:$0xff]
        %v1573 = vld [vmem:[%s6 + $0xb0] sm:$0xff]
        %v1574 = vld [vmem:[%s6 + $0xb8] sm:$0xff]
        %v1575 = vld [vmem:[%s6 + $0xc0] sm:$0xff]
        %v1576 = vld [vmem:[%s6 + $0xc8] sm:$0xff]
        %v1577 = vld [vmem:[%s6 + $0xd0] sm:$0xff]
        %v1578 = vld [vmem:[%s6 + $0xd8] sm:$0xff]
        %v1579 = vld [vmem:[%s6 + $0xe0] sm:$0xff]
        %v1580 = vld [vmem:[%s6 + $0xe8] sm:$0xff]
        %v1581 = vld [vmem:[%s6 + $0xf0] sm:$0xff]
        %v1582 = vld [vmem:[%s6 + $0xf8] sm:$0xff]
        %1584 = vset.pattern.permute.xlu0 0
        %1585 = vperm.xlu0 %1584, %v1551
        %v1586 = vpop.permute.xlu0 %1585
        %1589 = vset.pattern.permute.xlu0 0
        %1590 = vperm.xlu0 %1589, %v1552
        %v1591 = vpop.permute.xlu0 %1590
        %1594 = vset.pattern.permute.xlu0 0
        %1595 = vperm.xlu0 %1594, %v1553
        %v1596 = vpop.permute.xlu0 %1595
        %1599 = vset.pattern.permute.xlu0 0
        %1600 = vperm.xlu0 %1599, %v1554
        %v1601 = vpop.permute.xlu0 %1600
        %1604 = vset.pattern.permute.xlu0 0
        %1605 = vperm.xlu0 %1604, %v1555
        %v1606 = vpop.permute.xlu0 %1605
        %1609 = vset.pattern.permute.xlu0 0
        %1610 = vperm.xlu0 %1609, %v1556
        %v1611 = vpop.permute.xlu0 %1610
        %1614 = vset.pattern.permute.xlu0 0
        %1615 = vperm.xlu0 %1614, %v1557
        %v1616 = vpop.permute.xlu0 %1615
        %1619 = vset.pattern.permute.xlu0 0
        %1620 = vperm.xlu0 %1619, %v1558
        %v1621 = vpop.permute.xlu0 %1620
        %1624 = vset.pattern.permute.xlu0 0
        %1625 = vperm.xlu0 %1624, %v1559
        %v1626 = vpop.permute.xlu0 %1625
        %1629 = vset.pattern.permute.xlu0 0
        %1630 = vperm.xlu0 %1629, %v1560
        %v1631 = vpop.permute.xlu0 %1630
        %1634 = vset.pattern.permute.xlu0 0
        %1635 = vperm.xlu0 %1634, %v1561
        %v1636 = vpop.permute.xlu0 %1635
        %1639 = vset.pattern.permute.xlu0 0
        %1640 = vperm.xlu0 %1639, %v1562
        %v1641 = vpop.permute.xlu0 %1640
        %1644 = vset.pattern.permute.xlu0 0
        %1645 = vperm.xlu0 %1644, %v1563
        %v1646 = vpop.permute.xlu0 %1645
        %1649 = vset.pattern.permute.xlu0 0
        %1650 = vperm.xlu0 %1649, %v1564
        %v1651 = vpop.permute.xlu0 %1650
        %1654 = vset.pattern.permute.xlu0 0
        %1655 = vperm.xlu0 %1654, %v1565
        %v1656 = vpop.permute.xlu0 %1655
        %1659 = vset.pattern.permute.xlu0 0
        %1660 = vperm.xlu0 %1659, %v1566
        %v1661 = vpop.permute.xlu0 %1660
        %1664 = vset.pattern.permute.xlu0 0
        %1665 = vperm.xlu0 %1664, %v1567
        %v1666 = vpop.permute.xlu0 %1665
        %1669 = vset.pattern.permute.xlu0 0
        %1670 = vperm.xlu0 %1669, %v1568
        %v1671 = vpop.permute.xlu0 %1670
        %1674 = vset.pattern.permute.xlu0 0
        %1675 = vperm.xlu0 %1674, %v1569
        %v1676 = vpop.permute.xlu0 %1675
        %1679 = vset.pattern.permute.xlu0 0
        %1680 = vperm.xlu0 %1679, %v1570
        %v1681 = vpop.permute.xlu0 %1680
        %1684 = vset.pattern.permute.xlu0 0
        %1685 = vperm.xlu0 %1684, %v1571
        %v1686 = vpop.permute.xlu0 %1685
        %1689 = vset.pattern.permute.xlu0 0
        %1690 = vperm.xlu0 %1689, %v1572
        %v1691 = vpop.permute.xlu0 %1690
        %1694 = vset.pattern.permute.xlu0 0
        %1695 = vperm.xlu0 %1694, %v1573
        %v1696 = vpop.permute.xlu0 %1695
        %1699 = vset.pattern.permute.xlu0 0
        %1700 = vperm.xlu0 %1699, %v1574
        %v1701 = vpop.permute.xlu0 %1700
        %1704 = vset.pattern.permute.xlu0 0
        %1705 = vperm.xlu0 %1704, %v1575
        %v1706 = vpop.permute.xlu0 %1705
        %1709 = vset.pattern.permute.xlu0 0
        %1710 = vperm.xlu0 %1709, %v1576
        %v1711 = vpop.permute.xlu0 %1710
        %1714 = vset.pattern.permute.xlu0 0
        %1715 = vperm.xlu0 %1714, %v1577
        %v1716 = vpop.permute.xlu0 %1715
        %1719 = vset.pattern.permute.xlu0 0
        %1720 = vperm.xlu0 %1719, %v1578
        %v1721 = vpop.permute.xlu0 %1720
        %1724 = vset.pattern.permute.xlu0 0
        %1725 = vperm.xlu0 %1724, %v1579
        %v1726 = vpop.permute.xlu0 %1725
        %1729 = vset.pattern.permute.xlu0 0
        %1730 = vperm.xlu0 %1729, %v1580
        %v1731 = vpop.permute.xlu0 %1730
        %1734 = vset.pattern.permute.xlu0 0
        %1735 = vperm.xlu0 %1734, %v1581
        %v1736 = vpop.permute.xlu0 %1735
        %1739 = vset.pattern.permute.xlu0 0
        %1740 = vperm.xlu0 %1739, %v1582
        %v1741 = vpop.permute.xlu0 %1740
        %v1775 = vunpack.c.l.b16 %v1519
        %v1776 = vunpack.c.h.b16 %v1519
        %v1777 = vunpack.c.l.b16 %v1520
        %v1778 = vunpack.c.h.b16 %v1520
        %v1779 = vunpack.c.l.b16 %v1521
        %v1780 = vunpack.c.h.b16 %v1521
        %v1781 = vunpack.c.l.b16 %v1522
        %v1782 = vunpack.c.h.b16 %v1522
        %v1783 = vunpack.c.l.b16 %v1523
        %v1784 = vunpack.c.h.b16 %v1523
        %v1785 = vunpack.c.l.b16 %v1524
        %v1786 = vunpack.c.h.b16 %v1524
        %v1787 = vunpack.c.l.b16 %v1525
        %v1788 = vunpack.c.h.b16 %v1525
        %v1789 = vunpack.c.l.b16 %v1526
        %v1790 = vunpack.c.h.b16 %v1526
        %v1791 = vunpack.c.l.b16 %v1527
        %v1792 = vunpack.c.h.b16 %v1527
        %v1793 = vunpack.c.l.b16 %v1528
        %v1794 = vunpack.c.h.b16 %v1528
        %v1795 = vunpack.c.l.b16 %v1529
        %v1796 = vunpack.c.h.b16 %v1529
        %v1797 = vunpack.c.l.b16 %v1530
        %v1798 = vunpack.c.h.b16 %v1530
        %v1799 = vunpack.c.l.b16 %v1531
        %v1800 = vunpack.c.h.b16 %v1531
        %v1801 = vunpack.c.l.b16 %v1532
        %v1802 = vunpack.c.h.b16 %v1532
        %v1803 = vunpack.c.l.b16 %v1533
        %v1804 = vunpack.c.h.b16 %v1533
        %v1805 = vunpack.c.l.b16 %v1534
        %v1806 = vunpack.c.h.b16 %v1534
        %v1807 = vunpack.c.l.b16 %v1535
        %v1808 = vunpack.c.h.b16 %v1535
        %v1809 = vunpack.c.l.b16 %v1536
        %v1810 = vunpack.c.h.b16 %v1536
        %v1811 = vunpack.c.l.b16 %v1537
        %v1812 = vunpack.c.h.b16 %v1537
        %v1813 = vunpack.c.l.b16 %v1538
        %v1814 = vunpack.c.h.b16 %v1538
        %v1815 = vunpack.c.l.b16 %v1539
        %v1816 = vunpack.c.h.b16 %v1539
        %v1817 = vunpack.c.l.b16 %v1540
        %v1818 = vunpack.c.h.b16 %v1540
        %v1819 = vunpack.c.l.b16 %v1541
        %v1820 = vunpack.c.h.b16 %v1541
        %v1821 = vunpack.c.l.b16 %v1542
        %v1822 = vunpack.c.h.b16 %v1542
        %v1823 = vunpack.c.l.b16 %v1543
        %v1824 = vunpack.c.h.b16 %v1543
        %v1825 = vunpack.c.l.b16 %v1544
        %v1826 = vunpack.c.h.b16 %v1544
        %v1827 = vunpack.c.l.b16 %v1545
        %v1828 = vunpack.c.h.b16 %v1545
        %v1829 = vunpack.c.l.b16 %v1546
        %v1830 = vunpack.c.h.b16 %v1546
        %v1831 = vunpack.c.l.b16 %v1547
        %v1832 = vunpack.c.h.b16 %v1547
        %v1833 = vunpack.c.l.b16 %v1548
        %v1834 = vunpack.c.h.b16 %v1548
        %v1835 = vunpack.c.l.b16 %v1549
        %v1836 = vunpack.c.h.b16 %v1549
        %v1837 = vunpack.c.l.b16 %v1550
        %v1838 = vunpack.c.h.b16 %v1550
        %v1839 = vpack.c.b16 %v1777, %v1775
        %v1840 = vpack.c.b16 %v1778, %v1776
        %v1841 = vpack.c.b16 %v1781, %v1779
        %v1842 = vpack.c.b16 %v1782, %v1780
        %v1843 = vpack.c.b16 %v1785, %v1783
        %v1844 = vpack.c.b16 %v1786, %v1784
        %v1845 = vpack.c.b16 %v1789, %v1787
        %v1846 = vpack.c.b16 %v1790, %v1788
        %v1847 = vpack.c.b16 %v1793, %v1791
        %v1848 = vpack.c.b16 %v1794, %v1792
        %v1849 = vpack.c.b16 %v1797, %v1795
        %v1850 = vpack.c.b16 %v1798, %v1796
        %v1851 = vpack.c.b16 %v1801, %v1799
        %v1852 = vpack.c.b16 %v1802, %v1800
        %v1853 = vpack.c.b16 %v1805, %v1803
        %v1854 = vpack.c.b16 %v1806, %v1804
        %v1855 = vpack.c.b16 %v1809, %v1807
        %v1856 = vpack.c.b16 %v1810, %v1808
        %v1857 = vpack.c.b16 %v1813, %v1811
        %v1858 = vpack.c.b16 %v1814, %v1812
        %v1859 = vpack.c.b16 %v1817, %v1815
        %v1860 = vpack.c.b16 %v1818, %v1816
        %v1861 = vpack.c.b16 %v1821, %v1819
        %v1862 = vpack.c.b16 %v1822, %v1820
        %v1863 = vpack.c.b16 %v1825, %v1823
        %v1864 = vpack.c.b16 %v1826, %v1824
        %v1865 = vpack.c.b16 %v1829, %v1827
        %v1866 = vpack.c.b16 %v1830, %v1828
        %v1867 = vpack.c.b16 %v1833, %v1831
        %v1868 = vpack.c.b16 %v1834, %v1832
        %v1869 = vpack.c.b16 %v1837, %v1835
        %v1870 = vpack.c.b16 %v1838, %v1836
        %1903 = vmatpush.bf16.msra.mxu0 %v1492
        %1904 = vmatpush.bf16.msra.mxu0 %v1489
        %1905 = vmatpush.bf16.msra.mxu0 %v1486
        %1906 = vmatpush.bf16.msra.mxu0 %v1483
        %1907 = vmatpush.bf16.msra.mxu0 %v1480
        %1908 = vmatpush.bf16.msra.mxu0 %v1477
        %1909 = vmatpush.bf16.msra.mxu0 %v1474
        %1910 = vmatpush.bf16.msra.mxu0 %v1471
        %1911 = vmatmul.bf16.gmra.mxu0 %v1839
        %v1912 = vpop.f32.mrf.mxu0
        %v1913 = vadd.f32 %v1586, %v1912
        %v1914 = vpop.f32.mrf.mxu0
        %v1915 = vadd.f32 %v1591, %v1914
        %1916 = vmatmul.bf16.gmra.mxu0 %v1841
        %v1917 = vpop.f32.mrf.mxu0
        %v1918 = vadd.f32 %v1596, %v1917
        %v1919 = vpop.f32.mrf.mxu0
        %v1920 = vadd.f32 %v1601, %v1919
        %1921 = vmatmul.bf16.gmra.mxu0 %v1843
        %v1922 = vpop.f32.mrf.mxu0
        %v1923 = vadd.f32 %v1606, %v1922
        %v1924 = vpop.f32.mrf.mxu0
        %v1925 = vadd.f32 %v1611, %v1924
        %1926 = vmatmul.bf16.gmra.mxu0 %v1845
        %v1927 = vpop.f32.mrf.mxu0
        %v1928 = vadd.f32 %v1616, %v1927
        %v1929 = vpop.f32.mrf.mxu0
        %v1930 = vadd.f32 %v1621, %v1929
        %1931 = vmatmul.bf16.gmra.mxu0 %v1847
        %v1932 = vpop.f32.mrf.mxu0
        %v1933 = vadd.f32 %v1626, %v1932
        %v1934 = vpop.f32.mrf.mxu0
        %v1935 = vadd.f32 %v1631, %v1934
        %1936 = vmatmul.bf16.gmra.mxu0 %v1849
        %v1937 = vpop.f32.mrf.mxu0
        %v1938 = vadd.f32 %v1636, %v1937
        %v1939 = vpop.f32.mrf.mxu0
        %v1940 = vadd.f32 %v1641, %v1939
        %1941 = vmatmul.bf16.gmra.mxu0 %v1851
        %v1942 = vpop.f32.mrf.mxu0
        %v1943 = vadd.f32 %v1646, %v1942
        %v1944 = vpop.f32.mrf.mxu0
        %v1945 = vadd.f32 %v1651, %v1944
        %1946 = vmatmul.bf16.gmra.mxu0 %v1853
        %v1947 = vpop.f32.mrf.mxu0
        %v1948 = vadd.f32 %v1656, %v1947
        %v1949 = vpop.f32.mrf.mxu0
        %v1950 = vadd.f32 %v1661, %v1949
        %1951 = vmatmul.bf16.gmra.mxu0 %v1855
        %v1952 = vpop.f32.mrf.mxu0
        %v1953 = vadd.f32 %v1666, %v1952
        %v1954 = vpop.f32.mrf.mxu0
        %v1955 = vadd.f32 %v1671, %v1954
        %1956 = vmatmul.bf16.gmra.mxu0 %v1857
        %v1957 = vpop.f32.mrf.mxu0
        %v1958 = vadd.f32 %v1676, %v1957
        %v1959 = vpop.f32.mrf.mxu0
        %v1960 = vadd.f32 %v1681, %v1959
        %1961 = vmatmul.bf16.gmra.mxu0 %v1859
        %v1962 = vpop.f32.mrf.mxu0
        %v1963 = vadd.f32 %v1686, %v1962
        %v1964 = vpop.f32.mrf.mxu0
        %v1965 = vadd.f32 %v1691, %v1964
        %1966 = vmatmul.bf16.gmra.mxu0 %v1861
        %v1967 = vpop.f32.mrf.mxu0
        %v1968 = vadd.f32 %v1696, %v1967
        %v1969 = vpop.f32.mrf.mxu0
        %v1970 = vadd.f32 %v1701, %v1969
        %1971 = vmatmul.bf16.gmra.mxu0 %v1863
        %v1972 = vpop.f32.mrf.mxu0
        %v1973 = vadd.f32 %v1706, %v1972
        %v1974 = vpop.f32.mrf.mxu0
        %v1975 = vadd.f32 %v1711, %v1974
        %1976 = vmatmul.bf16.gmra.mxu0 %v1865
        %v1977 = vpop.f32.mrf.mxu0
        %v1978 = vadd.f32 %v1716, %v1977
        %v1979 = vpop.f32.mrf.mxu0
        %v1980 = vadd.f32 %v1721, %v1979
        %1981 = vmatmul.bf16.gmra.mxu0 %v1867
        %v1982 = vpop.f32.mrf.mxu0
        %v1983 = vadd.f32 %v1726, %v1982
        %v1984 = vpop.f32.mrf.mxu0
        %v1985 = vadd.f32 %v1731, %v1984
        %1986 = vmatmul.bf16.gmra.mxu0 %v1869
        %v1987 = vpop.f32.mrf.mxu0
        %v1988 = vadd.f32 %v1736, %v1987
        %v1989 = vpop.f32.mrf.mxu0
        %v1990 = vadd.f32 %v1741, %v1989
        %1991 = vdwg.mxu0
        %1992 = vmatpush.bf16.msra.mxu0 %v1516
        %1993 = vmatpush.bf16.msra.mxu0 %v1513
        %1994 = vmatpush.bf16.msra.mxu0 %v1510
        %1995 = vmatpush.bf16.msra.mxu0 %v1507
        %1996 = vmatpush.bf16.msra.mxu0 %v1504
        %1997 = vmatpush.bf16.msra.mxu0 %v1501
        %1998 = vmatpush.bf16.msra.mxu0 %v1498
        %1999 = vmatpush.bf16.msra.mxu0 %v1495
        %2000 = vmatmul.bf16.gmra.mxu0 %v1840
        %v2001 = vpop.f32.mrf.mxu0
        %v2002 = vadd.f32 %v1913, %v2001
        %v2003 = vpop.f32.mrf.mxu0
        %v2004 = vadd.f32 %v1915, %v2003
        %2005 = vmatmul.bf16.gmra.mxu0 %v1842
        %v2006 = vpop.f32.mrf.mxu0
        %v2007 = vadd.f32 %v1918, %v2006
        %v2008 = vpop.f32.mrf.mxu0
        %v2009 = vadd.f32 %v1920, %v2008
        %2010 = vmatmul.bf16.gmra.mxu0 %v1844
        %v2011 = vpop.f32.mrf.mxu0
        %v2012 = vadd.f32 %v1923, %v2011
        %v2013 = vpop.f32.mrf.mxu0
        %v2014 = vadd.f32 %v1925, %v2013
        %2015 = vmatmul.bf16.gmra.mxu0 %v1846
        %v2016 = vpop.f32.mrf.mxu0
        %v2017 = vadd.f32 %v1928, %v2016
        %v2018 = vpop.f32.mrf.mxu0
        %v2019 = vadd.f32 %v1930, %v2018
        %2020 = vmatmul.bf16.gmra.mxu0 %v1848
        %v2021 = vpop.f32.mrf.mxu0
        %v2022 = vadd.f32 %v1933, %v2021
        %v2023 = vpop.f32.mrf.mxu0
        %v2024 = vadd.f32 %v1935, %v2023
        %2025 = vmatmul.bf16.gmra.mxu0 %v1850
        %v2026 = vpop.f32.mrf.mxu0
        %v2027 = vadd.f32 %v1938, %v2026
        %v2028 = vpop.f32.mrf.mxu0
        %v2029 = vadd.f32 %v1940, %v2028
        %2030 = vmatmul.bf16.gmra.mxu0 %v1852
        %v2031 = vpop.f32.mrf.mxu0
        %v2032 = vadd.f32 %v1943, %v2031
        %v2033 = vpop.f32.mrf.mxu0
        %v2034 = vadd.f32 %v1945, %v2033
        %2035 = vmatmul.bf16.gmra.mxu0 %v1854
        %v2036 = vpop.f32.mrf.mxu0
        %v2037 = vadd.f32 %v1948, %v2036
        %v2038 = vpop.f32.mrf.mxu0
        %v2039 = vadd.f32 %v1950, %v2038
        %2040 = vmatmul.bf16.gmra.mxu0 %v1856
        %v2041 = vpop.f32.mrf.mxu0
        %v2042 = vadd.f32 %v1953, %v2041
        %v2043 = vpop.f32.mrf.mxu0
        %v2044 = vadd.f32 %v1955, %v2043
        %2045 = vmatmul.bf16.gmra.mxu0 %v1858
        %v2046 = vpop.f32.mrf.mxu0
        %v2047 = vadd.f32 %v1958, %v2046
        %v2048 = vpop.f32.mrf.mxu0
        %v2049 = vadd.f32 %v1960, %v2048
        %2050 = vmatmul.bf16.gmra.mxu0 %v1860
        %v2051 = vpop.f32.mrf.mxu0
        %v2052 = vadd.f32 %v1963, %v2051
        %v2053 = vpop.f32.mrf.mxu0
        %v2054 = vadd.f32 %v1965, %v2053
        %2055 = vmatmul.bf16.gmra.mxu0 %v1862
        %v2056 = vpop.f32.mrf.mxu0
        %v2057 = vadd.f32 %v1968, %v2056
        %v2058 = vpop.f32.mrf.mxu0
        %v2059 = vadd.f32 %v1970, %v2058
        %2060 = vmatmul.bf16.gmra.mxu0 %v1864
        %v2061 = vpop.f32.mrf.mxu0
        %v2062 = vadd.f32 %v1973, %v2061
        %v2063 = vpop.f32.mrf.mxu0
        %v2064 = vadd.f32 %v1975, %v2063
        %2065 = vmatmul.bf16.gmra.mxu0 %v1866
        %v2066 = vpop.f32.mrf.mxu0
        %v2067 = vadd.f32 %v1978, %v2066
        %v2068 = vpop.f32.mrf.mxu0
        %v2069 = vadd.f32 %v1980, %v2068
        %2070 = vmatmul.bf16.gmra.mxu0 %v1868
        %v2071 = vpop.f32.mrf.mxu0
        %v2072 = vadd.f32 %v1983, %v2071
        %v2073 = vpop.f32.mrf.mxu0
        %v2074 = vadd.f32 %v1985, %v2073
        %2075 = vmatmul.bf16.gmra.mxu0 %v1870
        %v2076 = vpop.f32.mrf.mxu0
        %v2077 = vadd.f32 %v1988, %v2076
        %v2078 = vpop.f32.mrf.mxu0
        %v2079 = vadd.f32 %v1990, %v2078
        %2080 = vdwg.mxu0
        %2081 = vmatpush.bf16.msra.mxu0 %v1493
        %2082 = vmatpush.bf16.msra.mxu0 %v1490
        %2083 = vmatpush.bf16.msra.mxu0 %v1487
        %2084 = vmatpush.bf16.msra.mxu0 %v1484
        %2085 = vmatpush.bf16.msra.mxu0 %v1481
        %2086 = vmatpush.bf16.msra.mxu0 %v1478
        %2087 = vmatpush.bf16.msra.mxu0 %v1475
        %2088 = vmatpush.bf16.msra.mxu0 %v1472
        %2089 = vmatmul.bf16.gmra.mxu0 %v1839
        %v2090 = vpop.f32.mrf.mxu0
        %v2091 = vadd.f32 %v1586, %v2090
        %v2092 = vpop.f32.mrf.mxu0
        %v2093 = vadd.f32 %v1591, %v2092
        %2094 = vmatmul.bf16.gmra.mxu0 %v1841
        %v2095 = vpop.f32.mrf.mxu0
        %v2096 = vadd.f32 %v1596, %v2095
        %v2097 = vpop.f32.mrf.mxu0
        %v2098 = vadd.f32 %v1601, %v2097
        %2099 = vmatmul.bf16.gmra.mxu0 %v1843
        %v2100 = vpop.f32.mrf.mxu0
        %v2101 = vadd.f32 %v1606, %v2100
        %v2102 = vpop.f32.mrf.mxu0
        %v2103 = vadd.f32 %v1611, %v2102
        %2104 = vmatmul.bf16.gmra.mxu0 %v1845
        %v2105 = vpop.f32.mrf.mxu0
        %v2106 = vadd.f32 %v1616, %v2105
        %v2107 = vpop.f32.mrf.mxu0
        %v2108 = vadd.f32 %v1621, %v2107
        %2109 = vmatmul.bf16.gmra.mxu0 %v1847
        %v2110 = vpop.f32.mrf.mxu0
        %v2111 = vadd.f32 %v1626, %v2110
        %v2112 = vpop.f32.mrf.mxu0
        %v2113 = vadd.f32 %v1631, %v2112
        %2114 = vmatmul.bf16.gmra.mxu0 %v1849
        %v2115 = vpop.f32.mrf.mxu0
        %v2116 = vadd.f32 %v1636, %v2115
        %v2117 = vpop.f32.mrf.mxu0
        %v2118 = vadd.f32 %v1641, %v2117
        %2119 = vmatmul.bf16.gmra.mxu0 %v1851
        %v2120 = vpop.f32.mrf.mxu0
        %v2121 = vadd.f32 %v1646, %v2120
        %v2122 = vpop.f32.mrf.mxu0
        %v2123 = vadd.f32 %v1651, %v2122
        %2124 = vmatmul.bf16.gmra.mxu0 %v1853
        %v2125 = vpop.f32.mrf.mxu0
        %v2126 = vadd.f32 %v1656, %v2125
        %v2127 = vpop.f32.mrf.mxu0
        %v2128 = vadd.f32 %v1661, %v2127
        %2129 = vmatmul.bf16.gmra.mxu0 %v1855
        %v2130 = vpop.f32.mrf.mxu0
        %v2131 = vadd.f32 %v1666, %v2130
        %v2132 = vpop.f32.mrf.mxu0
        %v2133 = vadd.f32 %v1671, %v2132
        %2134 = vmatmul.bf16.gmra.mxu0 %v1857
        %v2135 = vpop.f32.mrf.mxu0
        %v2136 = vadd.f32 %v1676, %v2135
        %v2137 = vpop.f32.mrf.mxu0
        %v2138 = vadd.f32 %v1681, %v2137
        %2139 = vmatmul.bf16.gmra.mxu0 %v1859
        %v2140 = vpop.f32.mrf.mxu0
        %v2141 = vadd.f32 %v1686, %v2140
        %v2142 = vpop.f32.mrf.mxu0
        %v2143 = vadd.f32 %v1691, %v2142
        %2144 = vmatmul.bf16.gmra.mxu0 %v1861
        %v2145 = vpop.f32.mrf.mxu0
        %v2146 = vadd.f32 %v1696, %v2145
        %v2147 = vpop.f32.mrf.mxu0
        %v2148 = vadd.f32 %v1701, %v2147
        %2149 = vmatmul.bf16.gmra.mxu0 %v1863
        %v2150 = vpop.f32.mrf.mxu0
        %v2151 = vadd.f32 %v1706, %v2150
        %v2152 = vpop.f32.mrf.mxu0
        %v2153 = vadd.f32 %v1711, %v2152
        %2154 = vmatmul.bf16.gmra.mxu0 %v1865
        %v2155 = vpop.f32.mrf.mxu0
        %v2156 = vadd.f32 %v1716, %v2155
        %v2157 = vpop.f32.mrf.mxu0
        %v2158 = vadd.f32 %v1721, %v2157
        %2159 = vmatmul.bf16.gmra.mxu0 %v1867
        %v2160 = vpop.f32.mrf.mxu0
        %v2161 = vadd.f32 %v1726, %v2160
        %v2162 = vpop.f32.mrf.mxu0
        %v2163 = vadd.f32 %v1731, %v2162
        %2164 = vmatmul.bf16.gmra.mxu0 %v1869
        %v2165 = vpop.f32.mrf.mxu0
        %v2166 = vadd.f32 %v1736, %v2165
        %v2167 = vpop.f32.mrf.mxu0
        %v2168 = vadd.f32 %v1741, %v2167
        %2169 = vdwg.mxu0
        %2170 = vmatpush.bf16.msra.mxu0 %v1517
        %2171 = vmatpush.bf16.msra.mxu0 %v1514
        %2172 = vmatpush.bf16.msra.mxu0 %v1511
        %2173 = vmatpush.bf16.msra.mxu0 %v1508
        %2174 = vmatpush.bf16.msra.mxu0 %v1505
        %2175 = vmatpush.bf16.msra.mxu0 %v1502
        %2176 = vmatpush.bf16.msra.mxu0 %v1499
        %2177 = vmatpush.bf16.msra.mxu0 %v1496
        %2178 = vmatmul.bf16.gmra.mxu0 %v1840
        %v2179 = vpop.f32.mrf.mxu0
        %v2180 = vadd.f32 %v2091, %v2179
        %v2181 = vpop.f32.mrf.mxu0
        %v2182 = vadd.f32 %v2093, %v2181
        %2183 = vmatmul.bf16.gmra.mxu0 %v1842
        %v2184 = vpop.f32.mrf.mxu0
        %v2185 = vadd.f32 %v2096, %v2184
        %v2186 = vpop.f32.mrf.mxu0
        %v2187 = vadd.f32 %v2098, %v2186
        %2188 = vmatmul.bf16.gmra.mxu0 %v1844
        %v2189 = vpop.f32.mrf.mxu0
        %v2190 = vadd.f32 %v2101, %v2189
        %v2191 = vpop.f32.mrf.mxu0
        %v2192 = vadd.f32 %v2103, %v2191
        %2193 = vmatmul.bf16.gmra.mxu0 %v1846
        %v2194 = vpop.f32.mrf.mxu0
        %v2195 = vadd.f32 %v2106, %v2194
        %v2196 = vpop.f32.mrf.mxu0
        %v2197 = vadd.f32 %v2108, %v2196
        %2198 = vmatmul.bf16.gmra.mxu0 %v1848
        %v2199 = vpop.f32.mrf.mxu0
        %v2200 = vadd.f32 %v2111, %v2199
        %v2201 = vpop.f32.mrf.mxu0
        %v2202 = vadd.f32 %v2113, %v2201
        %2203 = vmatmul.bf16.gmra.mxu0 %v1850
        %v2204 = vpop.f32.mrf.mxu0
        %v2205 = vadd.f32 %v2116, %v2204
        %v2206 = vpop.f32.mrf.mxu0
        %v2207 = vadd.f32 %v2118, %v2206
        %2208 = vmatmul.bf16.gmra.mxu0 %v1852
        %v2209 = vpop.f32.mrf.mxu0
        %v2210 = vadd.f32 %v2121, %v2209
        %v2211 = vpop.f32.mrf.mxu0
        %v2212 = vadd.f32 %v2123, %v2211
        %2213 = vmatmul.bf16.gmra.mxu0 %v1854
        %v2214 = vpop.f32.mrf.mxu0
        %v2215 = vadd.f32 %v2126, %v2214
        %v2216 = vpop.f32.mrf.mxu0
        %v2217 = vadd.f32 %v2128, %v2216
        %2218 = vmatmul.bf16.gmra.mxu0 %v1856
        %v2219 = vpop.f32.mrf.mxu0
        %v2220 = vadd.f32 %v2131, %v2219
        %v2221 = vpop.f32.mrf.mxu0
        %v2222 = vadd.f32 %v2133, %v2221
        %2223 = vmatmul.bf16.gmra.mxu0 %v1858
        %v2224 = vpop.f32.mrf.mxu0
        %v2225 = vadd.f32 %v2136, %v2224
        %v2226 = vpop.f32.mrf.mxu0
        %v2227 = vadd.f32 %v2138, %v2226
        %2228 = vmatmul.bf16.gmra.mxu0 %v1860
        %v2229 = vpop.f32.mrf.mxu0
        %v2230 = vadd.f32 %v2141, %v2229
        %v2231 = vpop.f32.mrf.mxu0
        %v2232 = vadd.f32 %v2143, %v2231
        %2233 = vmatmul.bf16.gmra.mxu0 %v1862
        %v2234 = vpop.f32.mrf.mxu0
        %v2235 = vadd.f32 %v2146, %v2234
        %v2236 = vpop.f32.mrf.mxu0
        %v2237 = vadd.f32 %v2148, %v2236
        %2238 = vmatmul.bf16.gmra.mxu0 %v1864
        %v2239 = vpop.f32.mrf.mxu0
        %v2240 = vadd.f32 %v2151, %v2239
        %v2241 = vpop.f32.mrf.mxu0
        %v2242 = vadd.f32 %v2153, %v2241
        %2243 = vmatmul.bf16.gmra.mxu0 %v1866
        %v2244 = vpop.f32.mrf.mxu0
        %v2245 = vadd.f32 %v2156, %v2244
        %v2246 = vpop.f32.mrf.mxu0
        %v2247 = vadd.f32 %v2158, %v2246
        %2248 = vmatmul.bf16.gmra.mxu0 %v1868
        %v2249 = vpop.f32.mrf.mxu0
        %v2250 = vadd.f32 %v2161, %v2249
        %v2251 = vpop.f32.mrf.mxu0
        %v2252 = vadd.f32 %v2163, %v2251
        %2253 = vmatmul.bf16.gmra.mxu0 %v1870
        %v2254 = vpop.f32.mrf.mxu0
        %v2255 = vadd.f32 %v2166, %v2254
        %v2256 = vpop.f32.mrf.mxu0
        %v2257 = vadd.f32 %v2168, %v2256
        %2258 = vdwg.mxu0
        %2259 = vmatpush.bf16.msra.mxu0 %v1494
        %2260 = vmatpush.bf16.msra.mxu0 %v1491
        %2261 = vmatpush.bf16.msra.mxu0 %v1488
        %2262 = vmatpush.bf16.msra.mxu0 %v1485
        %2263 = vmatpush.bf16.msra.mxu0 %v1482
        %2264 = vmatpush.bf16.msra.mxu0 %v1479
        %2265 = vmatpush.bf16.msra.mxu0 %v1476
        %2266 = vmatpush.bf16.msra.mxu0 %v1473
        %2267 = vmatmul.bf16.gmra.mxu0 %v1839
        %v2268 = vpop.f32.mrf.mxu0
        %v2269 = vadd.f32 %v1586, %v2268
        %v2270 = vpop.f32.mrf.mxu0
        %v2271 = vadd.f32 %v1591, %v2270
        %2272 = vmatmul.bf16.gmra.mxu0 %v1841
        %v2273 = vpop.f32.mrf.mxu0
        %v2274 = vadd.f32 %v1596, %v2273
        %v2275 = vpop.f32.mrf.mxu0
        %v2276 = vadd.f32 %v1601, %v2275
        %2277 = vmatmul.bf16.gmra.mxu0 %v1843
        %v2278 = vpop.f32.mrf.mxu0
        %v2279 = vadd.f32 %v1606, %v2278
        %v2280 = vpop.f32.mrf.mxu0
        %v2281 = vadd.f32 %v1611, %v2280
        %2282 = vmatmul.bf16.gmra.mxu0 %v1845
        %v2283 = vpop.f32.mrf.mxu0
        %v2284 = vadd.f32 %v1616, %v2283
        %v2285 = vpop.f32.mrf.mxu0
        %v2286 = vadd.f32 %v1621, %v2285
        %2287 = vmatmul.bf16.gmra.mxu0 %v1847
        %v2288 = vpop.f32.mrf.mxu0
        %v2289 = vadd.f32 %v1626, %v2288
        %v2290 = vpop.f32.mrf.mxu0
        %v2291 = vadd.f32 %v1631, %v2290
        %2292 = vmatmul.bf16.gmra.mxu0 %v1849
        %v2293 = vpop.f32.mrf.mxu0
        %v2294 = vadd.f32 %v1636, %v2293
        %v2295 = vpop.f32.mrf.mxu0
        %v2296 = vadd.f32 %v1641, %v2295
        %2297 = vmatmul.bf16.gmra.mxu0 %v1851
        %v2298 = vpop.f32.mrf.mxu0
        %v2299 = vadd.f32 %v1646, %v2298
        %v2300 = vpop.f32.mrf.mxu0
        %v2301 = vadd.f32 %v1651, %v2300
        %2302 = vmatmul.bf16.gmra.mxu0 %v1853
        %v2303 = vpop.f32.mrf.mxu0
        %v2304 = vadd.f32 %v1656, %v2303
        %v2305 = vpop.f32.mrf.mxu0
        %v2306 = vadd.f32 %v1661, %v2305
        %2307 = vmatmul.bf16.gmra.mxu0 %v1855
        %v2308 = vpop.f32.mrf.mxu0
        %v2309 = vadd.f32 %v1666, %v2308
        %v2310 = vpop.f32.mrf.mxu0
        %v2311 = vadd.f32 %v1671, %v2310
        %2312 = vmatmul.bf16.gmra.mxu0 %v1857
        %v2313 = vpop.f32.mrf.mxu0
        %v2314 = vadd.f32 %v1676, %v2313
        %v2315 = vpop.f32.mrf.mxu0
        %v2316 = vadd.f32 %v1681, %v2315
        %2317 = vmatmul.bf16.gmra.mxu0 %v1859
        %v2318 = vpop.f32.mrf.mxu0
        %v2319 = vadd.f32 %v1686, %v2318
        %v2320 = vpop.f32.mrf.mxu0
        %v2321 = vadd.f32 %v1691, %v2320
        %2322 = vmatmul.bf16.gmra.mxu0 %v1861
        %v2323 = vpop.f32.mrf.mxu0
        %v2324 = vadd.f32 %v1696, %v2323
        %v2325 = vpop.f32.mrf.mxu0
        %v2326 = vadd.f32 %v1701, %v2325
        %2327 = vmatmul.bf16.gmra.mxu0 %v1863
        %v2328 = vpop.f32.mrf.mxu0
        %v2329 = vadd.f32 %v1706, %v2328
        %v2330 = vpop.f32.mrf.mxu0
        %v2331 = vadd.f32 %v1711, %v2330
        %2332 = vmatmul.bf16.gmra.mxu0 %v1865
        %v2333 = vpop.f32.mrf.mxu0
        %v2334 = vadd.f32 %v1716, %v2333
        %v2335 = vpop.f32.mrf.mxu0
        %v2336 = vadd.f32 %v1721, %v2335
        %2337 = vmatmul.bf16.gmra.mxu0 %v1867
        %v2338 = vpop.f32.mrf.mxu0
        %v2339 = vadd.f32 %v1726, %v2338
        %v2340 = vpop.f32.mrf.mxu0
        %v2341 = vadd.f32 %v1731, %v2340
        %2342 = vmatmul.bf16.gmra.mxu0 %v1869
        %v2343 = vpop.f32.mrf.mxu0
        %v2344 = vadd.f32 %v1736, %v2343
        %v2345 = vpop.f32.mrf.mxu0
        %v2346 = vadd.f32 %v1741, %v2345
        %2347 = vdwg.mxu0
        %2348 = vmatpush.bf16.msra.mxu0 %v1518
        %2349 = vmatpush.bf16.msra.mxu0 %v1515
        %2350 = vmatpush.bf16.msra.mxu0 %v1512
        %2351 = vmatpush.bf16.msra.mxu0 %v1509
        %2352 = vmatpush.bf16.msra.mxu0 %v1506
        %2353 = vmatpush.bf16.msra.mxu0 %v1503
        %2354 = vmatpush.bf16.msra.mxu0 %v1500
        %2355 = vmatpush.bf16.msra.mxu0 %v1497
        %2356 = vmatmul.bf16.gmra.mxu0 %v1840
        %v2357 = vpop.f32.mrf.mxu0
        %v2358 = vadd.f32 %v2269, %v2357
        %v2359 = vpop.f32.mrf.mxu0
        %v2360 = vadd.f32 %v2271, %v2359
        %2361 = vmatmul.bf16.gmra.mxu0 %v1842
        %v2362 = vpop.f32.mrf.mxu0
        %v2363 = vadd.f32 %v2274, %v2362
        %v2364 = vpop.f32.mrf.mxu0
        %v2365 = vadd.f32 %v2276, %v2364
        %2366 = vmatmul.bf16.gmra.mxu0 %v1844
        %v2367 = vpop.f32.mrf.mxu0
        %v2368 = vadd.f32 %v2279, %v2367
        %v2369 = vpop.f32.mrf.mxu0
        %v2370 = vadd.f32 %v2281, %v2369
        %2371 = vmatmul.bf16.gmra.mxu0 %v1846
        %v2372 = vpop.f32.mrf.mxu0
        %v2373 = vadd.f32 %v2284, %v2372
        %v2374 = vpop.f32.mrf.mxu0
        %v2375 = vadd.f32 %v2286, %v2374
        %2376 = vmatmul.bf16.gmra.mxu0 %v1848
        %v2377 = vpop.f32.mrf.mxu0
        %v2378 = vadd.f32 %v2289, %v2377
        %v2379 = vpop.f32.mrf.mxu0
        %v2380 = vadd.f32 %v2291, %v2379
        %2381 = vmatmul.bf16.gmra.mxu0 %v1850
        %v2382 = vpop.f32.mrf.mxu0
        %v2383 = vadd.f32 %v2294, %v2382
        %v2384 = vpop.f32.mrf.mxu0
        %v2385 = vadd.f32 %v2296, %v2384
        %2386 = vmatmul.bf16.gmra.mxu0 %v1852
        %v2387 = vpop.f32.mrf.mxu0
        %v2388 = vadd.f32 %v2299, %v2387
        %v2389 = vpop.f32.mrf.mxu0
        %v2390 = vadd.f32 %v2301, %v2389
        %2391 = vmatmul.bf16.gmra.mxu0 %v1854
        %v2392 = vpop.f32.mrf.mxu0
        %v2393 = vadd.f32 %v2304, %v2392
        %v2394 = vpop.f32.mrf.mxu0
        %v2395 = vadd.f32 %v2306, %v2394
        %2396 = vmatmul.bf16.gmra.mxu0 %v1856
        %v2397 = vpop.f32.mrf.mxu0
        %v2398 = vadd.f32 %v2309, %v2397
        %v2399 = vpop.f32.mrf.mxu0
        %v2400 = vadd.f32 %v2311, %v2399
        %2401 = vmatmul.bf16.gmra.mxu0 %v1858
        %v2402 = vpop.f32.mrf.mxu0
        %v2403 = vadd.f32 %v2314, %v2402
        %v2404 = vpop.f32.mrf.mxu0
        %v2405 = vadd.f32 %v2316, %v2404
        %2406 = vmatmul.bf16.gmra.mxu0 %v1860
        %v2407 = vpop.f32.mrf.mxu0
        %v2408 = vadd.f32 %v2319, %v2407
        %v2409 = vpop.f32.mrf.mxu0
        %v2410 = vadd.f32 %v2321, %v2409
        %2411 = vmatmul.bf16.gmra.mxu0 %v1862
        %v2412 = vpop.f32.mrf.mxu0
        %v2413 = vadd.f32 %v2324, %v2412
        %v2414 = vpop.f32.mrf.mxu0
        %v2415 = vadd.f32 %v2326, %v2414
        %2416 = vmatmul.bf16.gmra.mxu0 %v1864
        %v2417 = vpop.f32.mrf.mxu0
        %v2418 = vadd.f32 %v2329, %v2417
        %v2419 = vpop.f32.mrf.mxu0
        %v2420 = vadd.f32 %v2331, %v2419
        %2421 = vmatmul.bf16.gmra.mxu0 %v1866
        %v2422 = vpop.f32.mrf.mxu0
        %v2423 = vadd.f32 %v2334, %v2422
        %v2424 = vpop.f32.mrf.mxu0
        %v2425 = vadd.f32 %v2336, %v2424
        %2426 = vmatmul.bf16.gmra.mxu0 %v1868
        %v2427 = vpop.f32.mrf.mxu0
        %v2428 = vadd.f32 %v2339, %v2427
        %v2429 = vpop.f32.mrf.mxu0
        %v2430 = vadd.f32 %v2341, %v2429
        %2431 = vmatmul.bf16.gmra.mxu0 %v1870
        %v2432 = vpop.f32.mrf.mxu0
        %v2433 = vadd.f32 %v2344, %v2432
        %v2434 = vpop.f32.mrf.mxu0
        %v2435 = vadd.f32 %v2346, %v2434
        %2436 = vdwg.mxu0
        %v2437 = vmax.f32 %v2002, 0.0
        %v2438 = vmax.f32 %v2180, 0.0
        %v2439 = vmax.f32 %v2358, 0.0
        %v2440 = vmax.f32 %v2004, 0.0
        %v2441 = vmax.f32 %v2182, 0.0
        %v2442 = vmax.f32 %v2360, 0.0
        %v2443 = vmax.f32 %v2007, 0.0
        %v2444 = vmax.f32 %v2185, 0.0
        %v2445 = vmax.f32 %v2363, 0.0
        %v2446 = vmax.f32 %v2009, 0.0
        %v2447 = vmax.f32 %v2187, 0.0
        %v2448 = vmax.f32 %v2365, 0.0
        %v2449 = vmax.f32 %v2012, 0.0
        %v2450 = vmax.f32 %v2190, 0.0
        %v2451 = vmax.f32 %v2368, 0.0
        %v2452 = vmax.f32 %v2014, 0.0
        %v2453 = vmax.f32 %v2192, 0.0
        %v2454 = vmax.f32 %v2370, 0.0
        %v2455 = vmax.f32 %v2017, 0.0
        %v2456 = vmax.f32 %v2195, 0.0
        %v2457 = vmax.f32 %v2373, 0.0
        %v2458 = vmax.f32 %v2019, 0.0
        %v2459 = vmax.f32 %v2197, 0.0
        %v2460 = vmax.f32 %v2375, 0.0
        %v2461 = vmax.f32 %v2022, 0.0
        %v2462 = vmax.f32 %v2200, 0.0
        %v2463 = vmax.f32 %v2378, 0.0
        %v2464 = vmax.f32 %v2024, 0.0
        %v2465 = vmax.f32 %v2202, 0.0
        %v2466 = vmax.f32 %v2380, 0.0
        %v2467 = vmax.f32 %v2027, 0.0
        %v2468 = vmax.f32 %v2205, 0.0
        %v2469 = vmax.f32 %v2383, 0.0
        %v2470 = vmax.f32 %v2029, 0.0
        %v2471 = vmax.f32 %v2207, 0.0
        %v2472 = vmax.f32 %v2385, 0.0
        %v2473 = vmax.f32 %v2032, 0.0
        %v2474 = vmax.f32 %v2210, 0.0
        %v2475 = vmax.f32 %v2388, 0.0
        %v2476 = vmax.f32 %v2034, 0.0
        %v2477 = vmax.f32 %v2212, 0.0
        %v2478 = vmax.f32 %v2390, 0.0
        %v2479 = vmax.f32 %v2037, 0.0
        %v2480 = vmax.f32 %v2215, 0.0
        %v2481 = vmax.f32 %v2393, 0.0
        %v2482 = vmax.f32 %v2039, 0.0
        %v2483 = vmax.f32 %v2217, 0.0
        %v2484 = vmax.f32 %v2395, 0.0
        %v2485 = vmax.f32 %v2042, 0.0
        %v2486 = vmax.f32 %v2220, 0.0
        %v2487 = vmax.f32 %v2398, 0.0
        %v2488 = vmax.f32 %v2044, 0.0
        %v2489 = vmax.f32 %v2222, 0.0
        %v2490 = vmax.f32 %v2400, 0.0
        %v2491 = vmax.f32 %v2047, 0.0
        %v2492 = vmax.f32 %v2225, 0.0
        %v2493 = vmax.f32 %v2403, 0.0
        %v2494 = vmax.f32 %v2049, 0.0
        %v2495 = vmax.f32 %v2227, 0.0
        %v2496 = vmax.f32 %v2405, 0.0
        %v2497 = vmax.f32 %v2052, 0.0
        %v2498 = vmax.f32 %v2230, 0.0
        %v2499 = vmax.f32 %v2408, 0.0
        %v2500 = vmax.f32 %v2054, 0.0
        %v2501 = vmax.f32 %v2232, 0.0
        %v2502 = vmax.f32 %v2410, 0.0
        %v2503 = vmax.f32 %v2057, 0.0
        %v2504 = vmax.f32 %v2235, 0.0
        %v2505 = vmax.f32 %v2413, 0.0
        %v2506 = vmax.f32 %v2059, 0.0
        %v2507 = vmax.f32 %v2237, 0.0
        %v2508 = vmax.f32 %v2415, 0.0
        %v2509 = vmax.f32 %v2062, 0.0
        %v2510 = vmax.f32 %v2240, 0.0
        %v2511 = vmax.f32 %v2418, 0.0
        %v2512 = vmax.f32 %v2064, 0.0
        %v2513 = vmax.f32 %v2242, 0.0
        %v2514 = vmax.f32 %v2420, 0.0
        %v2515 = vmax.f32 %v2067, 0.0
        %v2516 = vmax.f32 %v2245, 0.0
        %v2517 = vmax.f32 %v2423, 0.0
        %v2518 = vmax.f32 %v2069, 0.0
        %v2519 = vmax.f32 %v2247, 0.0
        %v2520 = vmax.f32 %v2425, 0.0
        %v2521 = vmax.f32 %v2072, 0.0
        %v2522 = vmax.f32 %v2250, 0.0
        %v2523 = vmax.f32 %v2428, 0.0
        %v2524 = vmax.f32 %v2074, 0.0
        %v2525 = vmax.f32 %v2252, 0.0
        %v2526 = vmax.f32 %v2430, 0.0
        %v2527 = vmax.f32 %v2077, 0.0
        %v2528 = vmax.f32 %v2255, 0.0
        %v2529 = vmax.f32 %v2433, 0.0
        %v2530 = vmax.f32 %v2079, 0.0
        %v2531 = vmax.f32 %v2257, 0.0
        %v2532 = vmax.f32 %v2435, 0.0
        %v2533 = vld [vmem:[%s7] sm:$0xff]
        %v2534 = vld [vmem:[%s7 + $0x8] sm:$0xff]
        %v2535 = vld [vmem:[%s7 + $0x10] sm:$0xff]
        %v2536 = vld [vmem:[%s7 + $0x18] sm:$0xff]
        %v2537 = vld [vmem:[%s7 + $0x20] sm:$0xff]
        %v2538 = vld [vmem:[%s7 + $0x28] sm:$0xff]
        %v2539 = vld [vmem:[%s7 + $0x30] sm:$0xff]
        %v2540 = vld [vmem:[%s7 + $0x38] sm:$0xff]
        %v2541 = vld [vmem:[%s7 + $0x40] sm:$0xff]
        %v2542 = vld [vmem:[%s7 + $0x48] sm:$0xff]
        %v2543 = vld [vmem:[%s7 + $0x50] sm:$0xff]
        %v2544 = vld [vmem:[%s7 + $0x58] sm:$0xff]
        %v2545 = vld [vmem:[%s7 + $0x60] sm:$0xff]
        %v2546 = vld [vmem:[%s7 + $0x68] sm:$0xff]
        %v2547 = vld [vmem:[%s7 + $0x70] sm:$0xff]
        %v2548 = vld [vmem:[%s7 + $0x78] sm:$0xff]
        %v2549 = vld [vmem:[%s7 + $0x80] sm:$0xff]
        %v2550 = vld [vmem:[%s7 + $0x88] sm:$0xff]
        %v2551 = vld [vmem:[%s7 + $0x90] sm:$0xff]
        %v2552 = vld [vmem:[%s7 + $0x98] sm:$0xff]
        %v2553 = vld [vmem:[%s7 + $0xa0] sm:$0xff]
        %v2554 = vld [vmem:[%s7 + $0xa8] sm:$0xff]
        %v2555 = vld [vmem:[%s7 + $0xb0] sm:$0xff]
        %v2556 = vld [vmem:[%s7 + $0xb8] sm:$0xff]
        %v2557 = vld [vmem:[%s7 + $0xc0] sm:$0xff]
        %v2558 = vld [vmem:[%s7 + $0xc8] sm:$0xff]
        %v2559 = vld [vmem:[%s7 + $0xd0] sm:$0xff]
        %v2560 = vld [vmem:[%s7 + $0xd8] sm:$0xff]
        %v2561 = vld [vmem:[%s7 + $0xe0] sm:$0xff]
        %v2562 = vld [vmem:[%s7 + $0xe8] sm:$0xff]
        %v2563 = vld [vmem:[%s7 + $0xf0] sm:$0xff]
        %v2564 = vld [vmem:[%s7 + $0xf8] sm:$0xff]
        %2566 = vset.pattern.permute.xlu0 0
        %2567 = vperm.xlu0 %2566, %v2533
        %v2568 = vpop.permute.xlu0 %2567
        %2571 = vset.pattern.permute.xlu0 0
        %2572 = vperm.xlu0 %2571, %v2534
        %v2573 = vpop.permute.xlu0 %2572
        %2576 = vset.pattern.permute.xlu0 0
        %2577 = vperm.xlu0 %2576, %v2535
        %v2578 = vpop.permute.xlu0 %2577
        %2581 = vset.pattern.permute.xlu0 0
        %2582 = vperm.xlu0 %2581, %v2536
        %v2583 = vpop.permute.xlu0 %2582
        %2586 = vset.pattern.permute.xlu0 0
        %2587 = vperm.xlu0 %2586, %v2537
        %v2588 = vpop.permute.xlu0 %2587
        %2591 = vset.pattern.permute.xlu0 0
        %2592 = vperm.xlu0 %2591, %v2538
        %v2593 = vpop.permute.xlu0 %2592
        %2596 = vset.pattern.permute.xlu0 0
        %2597 = vperm.xlu0 %2596, %v2539
        %v2598 = vpop.permute.xlu0 %2597
        %2601 = vset.pattern.permute.xlu0 0
        %2602 = vperm.xlu0 %2601, %v2540
        %v2603 = vpop.permute.xlu0 %2602
        %2606 = vset.pattern.permute.xlu0 0
        %2607 = vperm.xlu0 %2606, %v2541
        %v2608 = vpop.permute.xlu0 %2607
        %2611 = vset.pattern.permute.xlu0 0
        %2612 = vperm.xlu0 %2611, %v2542
        %v2613 = vpop.permute.xlu0 %2612
        %2616 = vset.pattern.permute.xlu0 0
        %2617 = vperm.xlu0 %2616, %v2543
        %v2618 = vpop.permute.xlu0 %2617
        %2621 = vset.pattern.permute.xlu0 0
        %2622 = vperm.xlu0 %2621, %v2544
        %v2623 = vpop.permute.xlu0 %2622
        %2626 = vset.pattern.permute.xlu0 0
        %2627 = vperm.xlu0 %2626, %v2545
        %v2628 = vpop.permute.xlu0 %2627
        %2631 = vset.pattern.permute.xlu0 0
        %2632 = vperm.xlu0 %2631, %v2546
        %v2633 = vpop.permute.xlu0 %2632
        %2636 = vset.pattern.permute.xlu0 0
        %2637 = vperm.xlu0 %2636, %v2547
        %v2638 = vpop.permute.xlu0 %2637
        %2641 = vset.pattern.permute.xlu0 0
        %2642 = vperm.xlu0 %2641, %v2548
        %v2643 = vpop.permute.xlu0 %2642
        %2646 = vset.pattern.permute.xlu0 0
        %2647 = vperm.xlu0 %2646, %v2549
        %v2648 = vpop.permute.xlu0 %2647
        %2651 = vset.pattern.permute.xlu0 0
        %2652 = vperm.xlu0 %2651, %v2550
        %v2653 = vpop.permute.xlu0 %2652
        %2656 = vset.pattern.permute.xlu0 0
        %2657 = vperm.xlu0 %2656, %v2551
        %v2658 = vpop.permute.xlu0 %2657
        %2661 = vset.pattern.permute.xlu0 0
        %2662 = vperm.xlu0 %2661, %v2552
        %v2663 = vpop.permute.xlu0 %2662
        %2666 = vset.pattern.permute.xlu0 0
        %2667 = vperm.xlu0 %2666, %v2553
        %v2668 = vpop.permute.xlu0 %2667
        %2671 = vset.pattern.permute.xlu0 0
        %2672 = vperm.xlu0 %2671, %v2554
        %v2673 = vpop.permute.xlu0 %2672
        %2676 = vset.pattern.permute.xlu0 0
        %2677 = vperm.xlu0 %2676, %v2555
        %v2678 = vpop.permute.xlu0 %2677
        %2681 = vset.pattern.permute.xlu0 0
        %2682 = vperm.xlu0 %2681, %v2556
        %v2683 = vpop.permute.xlu0 %2682
        %2686 = vset.pattern.permute.xlu0 0
        %2687 = vperm.xlu0 %2686, %v2557
        %v2688 = vpop.permute.xlu0 %2687
        %2691 = vset.pattern.permute.xlu0 0
        %2692 = vperm.xlu0 %2691, %v2558
        %v2693 = vpop.permute.xlu0 %2692
        %2696 = vset.pattern.permute.xlu0 0
        %2697 = vperm.xlu0 %2696, %v2559
        %v2698 = vpop.permute.xlu0 %2697
        %2701 = vset.pattern.permute.xlu0 0
        %2702 = vperm.xlu0 %2701, %v2560
        %v2703 = vpop.permute.xlu0 %2702
        %2706 = vset.pattern.permute.xlu0 0
        %2707 = vperm.xlu0 %2706, %v2561
        %v2708 = vpop.permute.xlu0 %2707
        %2711 = vset.pattern.permute.xlu0 0
        %2712 = vperm.xlu0 %2711, %v2562
        %v2713 = vpop.permute.xlu0 %2712
        %2716 = vset.pattern.permute.xlu0 0
        %2717 = vperm.xlu0 %2716, %v2563
        %v2718 = vpop.permute.xlu0 %2717
        %2721 = vset.pattern.permute.xlu0 0
        %2722 = vperm.xlu0 %2721, %v2564
        %v2723 = vpop.permute.xlu0 %2722
        %v2725 = vmul.f32 %v2437, %v2568
        %v2726 = vmul.f32 %v2438, %v2568
        %v2727 = vmul.f32 %v2439, %v2568
        %v2728 = vmul.f32 %v2440, %v2573
        %v2729 = vmul.f32 %v2441, %v2573
        %v2730 = vmul.f32 %v2442, %v2573
        %v2731 = vmul.f32 %v2443, %v2578
        %v2732 = vmul.f32 %v2444, %v2578
        %v2733 = vmul.f32 %v2445, %v2578
        %v2734 = vmul.f32 %v2446, %v2583
        %v2735 = vmul.f32 %v2447, %v2583
        %v2736 = vmul.f32 %v2448, %v2583
        %v2737 = vmul.f32 %v2449, %v2588
        %v2738 = vmul.f32 %v2450, %v2588
        %v2739 = vmul.f32 %v2451, %v2588
        %v2740 = vmul.f32 %v2452, %v2593
        %v2741 = vmul.f32 %v2453, %v2593
        %v2742 = vmul.f32 %v2454, %v2593
        %v2743 = vmul.f32 %v2455, %v2598
        %v2744 = vmul.f32 %v2456, %v2598
        %v2745 = vmul.f32 %v2457, %v2598
        %v2746 = vmul.f32 %v2458, %v2603
        %v2747 = vmul.f32 %v2459, %v2603
        %v2748 = vmul.f32 %v2460, %v2603
        %v2749 = vmul.f32 %v2461, %v2608
        %v2750 = vmul.f32 %v2462, %v2608
        %v2751 = vmul.f32 %v2463, %v2608
        %v2752 = vmul.f32 %v2464, %v2613
        %v2753 = vmul.f32 %v2465, %v2613
        %v2754 = vmul.f32 %v2466, %v2613
        %v2755 = vmul.f32 %v2467, %v2618
        %v2756 = vmul.f32 %v2468, %v2618
        %v2757 = vmul.f32 %v2469, %v2618
        %v2758 = vmul.f32 %v2470, %v2623
        %v2759 = vmul.f32 %v2471, %v2623
        %v2760 = vmul.f32 %v2472, %v2623
        %v2761 = vmul.f32 %v2473, %v2628
        %v2762 = vmul.f32 %v2474, %v2628
        %v2763 = vmul.f32 %v2475, %v2628
        %v2764 = vmul.f32 %v2476, %v2633
        %v2765 = vmul.f32 %v2477, %v2633
        %v2766 = vmul.f32 %v2478, %v2633
        %v2767 = vmul.f32 %v2479, %v2638
        %v2768 = vmul.f32 %v2480, %v2638
        %v2769 = vmul.f32 %v2481, %v2638
        %v2770 = vmul.f32 %v2482, %v2643
        %v2771 = vmul.f32 %v2483, %v2643
        %v2772 = vmul.f32 %v2484, %v2643
        %v2773 = vmul.f32 %v2485, %v2648
        %v2774 = vmul.f32 %v2486, %v2648
        %v2775 = vmul.f32 %v2487, %v2648
        %v2776 = vmul.f32 %v2488, %v2653
        %v2777 = vmul.f32 %v2489, %v2653
        %v2778 = vmul.f32 %v2490, %v2653
        %v2779 = vmul.f32 %v2491, %v2658
        %v2780 = vmul.f32 %v2492, %v2658
        %v2781 = vmul.f32 %v2493, %v2658
        %v2782 = vmul.f32 %v2494, %v2663
        %v2783 = vmul.f32 %v2495, %v2663
        %v2784 = vmul.f32 %v2496, %v2663
        %v2785 = vmul.f32 %v2497, %v2668
        %v2786 = vmul.f32 %v2498, %v2668
        %v2787 = vmul.f32 %v2499, %v2668
        %v2788 = vmul.f32 %v2500, %v2673
        %v2789 = vmul.f32 %v2501, %v2673
        %v2790 = vmul.f32 %v2502, %v2673
        %v2791 = vmul.f32 %v2503, %v2678
        %v2792 = vmul.f32 %v2504, %v2678
        %v2793 = vmul.f32 %v2505, %v2678
        %v2794 = vmul.f32 %v2506, %v2683
        %v2795 = vmul.f32 %v2507, %v2683
        %v2796 = vmul.f32 %v2508, %v2683
        %v2797 = vmul.f32 %v2509, %v2688
        %v2798 = vmul.f32 %v2510, %v2688
        %v2799 = vmul.f32 %v2511, %v2688
        %v2800 = vmul.f32 %v2512, %v2693
        %v2801 = vmul.f32 %v2513, %v2693
        %v2802 = vmul.f32 %v2514, %v2693
        %v2803 = vmul.f32 %v2515, %v2698
        %v2804 = vmul.f32 %v2516, %v2698
        %v2805 = vmul.f32 %v2517, %v2698
        %v2806 = vmul.f32 %v2518, %v2703
        %v2807 = vmul.f32 %v2519, %v2703
        %v2808 = vmul.f32 %v2520, %v2703
        %v2809 = vmul.f32 %v2521, %v2708
        %v2810 = vmul.f32 %v2522, %v2708
        %v2811 = vmul.f32 %v2523, %v2708
        %v2812 = vmul.f32 %v2524, %v2713
        %v2813 = vmul.f32 %v2525, %v2713
        %v2814 = vmul.f32 %v2526, %v2713
        %v2815 = vmul.f32 %v2527, %v2718
        %v2816 = vmul.f32 %v2528, %v2718
        %v2817 = vmul.f32 %v2529, %v2718
        %v2818 = vmul.f32 %v2530, %v2723
        %v2819 = vmul.f32 %v2531, %v2723
        %v2820 = vmul.f32 %v2532, %v2723
        %v2821 = vadd.f32 %v2725, %v2728
        %v2822 = vadd.f32 %v2821, %v2731
        %v2823 = vadd.f32 %v2822, %v2734
        %v2824 = vadd.f32 %v2823, %v2737
        %v2825 = vadd.f32 %v2824, %v2740
        %v2826 = vadd.f32 %v2825, %v2743
        %v2827 = vadd.f32 %v2826, %v2746
        %v2828 = vadd.f32 %v2827, %v2749
        %v2829 = vadd.f32 %v2828, %v2752
        %v2830 = vadd.f32 %v2829, %v2755
        %v2831 = vadd.f32 %v2830, %v2758
        %v2832 = vadd.f32 %v2831, %v2761
        %v2833 = vadd.f32 %v2832, %v2764
        %v2834 = vadd.f32 %v2833, %v2767
        %v2835 = vadd.f32 %v2834, %v2770
        %v2836 = vadd.f32 %v2835, %v2773
        %v2837 = vadd.f32 %v2836, %v2776
        %v2838 = vadd.f32 %v2837, %v2779
        %v2839 = vadd.f32 %v2838, %v2782
        %v2840 = vadd.f32 %v2839, %v2785
        %v2841 = vadd.f32 %v2840, %v2788
        %v2842 = vadd.f32 %v2841, %v2791
        %v2843 = vadd.f32 %v2842, %v2794
        %v2844 = vadd.f32 %v2843, %v2797
        %v2845 = vadd.f32 %v2844, %v2800
        %v2846 = vadd.f32 %v2845, %v2803
        %v2847 = vadd.f32 %v2846, %v2806
        %v2848 = vadd.f32 %v2847, %v2809
        %v2849 = vadd.f32 %v2848, %v2812
        %v2850 = vadd.f32 %v2849, %v2815
        %v2851 = vadd.f32 %v2850, %v2818
        %v2852 = vrot.slane %v2851, 4
        %v2853 = vadd.f32 %v2851, %v2852
        %v2854 = vrot.slane %v2853, 2
        %v2855 = vadd.f32 %v2853, %v2854
        %v2856 = vrot.slane %v2855, 1
        %v2857 = vadd.f32 %v2855, %v2856
        %v2858 = vadd.f32 %v2726, %v2729
        %v2859 = vadd.f32 %v2858, %v2732
        %v2860 = vadd.f32 %v2859, %v2735
        %v2861 = vadd.f32 %v2860, %v2738
        %v2862 = vadd.f32 %v2861, %v2741
        %v2863 = vadd.f32 %v2862, %v2744
        %v2864 = vadd.f32 %v2863, %v2747
        %v2865 = vadd.f32 %v2864, %v2750
        %v2866 = vadd.f32 %v2865, %v2753
        %v2867 = vadd.f32 %v2866, %v2756
        %v2868 = vadd.f32 %v2867, %v2759
        %v2869 = vadd.f32 %v2868, %v2762
        %v2870 = vadd.f32 %v2869, %v2765
        %v2871 = vadd.f32 %v2870, %v2768
        %v2872 = vadd.f32 %v2871, %v2771
        %v2873 = vadd.f32 %v2872, %v2774
        %v2874 = vadd.f32 %v2873, %v2777
        %v2875 = vadd.f32 %v2874, %v2780
        %v2876 = vadd.f32 %v2875, %v2783
        %v2877 = vadd.f32 %v2876, %v2786
        %v2878 = vadd.f32 %v2877, %v2789
        %v2879 = vadd.f32 %v2878, %v2792
        %v2880 = vadd.f32 %v2879, %v2795
        %v2881 = vadd.f32 %v2880, %v2798
        %v2882 = vadd.f32 %v2881, %v2801
        %v2883 = vadd.f32 %v2882, %v2804
        %v2884 = vadd.f32 %v2883, %v2807
        %v2885 = vadd.f32 %v2884, %v2810
        %v2886 = vadd.f32 %v2885, %v2813
        %v2887 = vadd.f32 %v2886, %v2816
        %v2888 = vadd.f32 %v2887, %v2819
        %v2889 = vrot.slane %v2888, 4
        %v2890 = vadd.f32 %v2888, %v2889
        %v2891 = vrot.slane %v2890, 2
        %v2892 = vadd.f32 %v2890, %v2891
        %v2893 = vrot.slane %v2892, 1
        %v2894 = vadd.f32 %v2892, %v2893
        %v2895 = vadd.f32 %v2727, %v2730
        %v2896 = vadd.f32 %v2895, %v2733
        %v2897 = vadd.f32 %v2896, %v2736
        %v2898 = vadd.f32 %v2897, %v2739
        %v2899 = vadd.f32 %v2898, %v2742
        %v2900 = vadd.f32 %v2899, %v2745
        %v2901 = vadd.f32 %v2900, %v2748
        %v2902 = vadd.f32 %v2901, %v2751
        %v2903 = vadd.f32 %v2902, %v2754
        %v2904 = vadd.f32 %v2903, %v2757
        %v2905 = vadd.f32 %v2904, %v2760
        %v2906 = vadd.f32 %v2905, %v2763
        %v2907 = vadd.f32 %v2906, %v2766
        %v2908 = vadd.f32 %v2907, %v2769
        %v2909 = vadd.f32 %v2908, %v2772
        %v2910 = vadd.f32 %v2909, %v2775
        %v2911 = vadd.f32 %v2910, %v2778
        %v2912 = vadd.f32 %v2911, %v2781
        %v2913 = vadd.f32 %v2912, %v2784
        %v2914 = vadd.f32 %v2913, %v2787
        %v2915 = vadd.f32 %v2914, %v2790
        %v2916 = vadd.f32 %v2915, %v2793
        %v2917 = vadd.f32 %v2916, %v2796
        %v2918 = vadd.f32 %v2917, %v2799
        %v2919 = vadd.f32 %v2918, %v2802
        %v2920 = vadd.f32 %v2919, %v2805
        %v2921 = vadd.f32 %v2920, %v2808
        %v2922 = vadd.f32 %v2921, %v2811
        %v2923 = vadd.f32 %v2922, %v2814
        %v2924 = vadd.f32 %v2923, %v2817
        %v2925 = vadd.f32 %v2924, %v2820
        %v2926 = vrot.slane %v2925, 4
        %v2927 = vadd.f32 %v2925, %v2926
        %v2928 = vrot.slane %v2927, 2
        %v2929 = vadd.f32 %v2927, %v2928
        %v2930 = vrot.slane %v2929, 1
        %v2931 = vadd.f32 %v2929, %v2930
        %v2932 = vld [vmem:[#allocation2] sm:$0x1]
        %2934 = vset.pattern.permute.xlu0 0
        %2935 = vperm.xlu0 %2934, %v2932
        %v2936 = vpop.permute.xlu0 %2935
        %v2938 = vperm.slane %v2936, 0
        %v2939 = vadd.f32 %v2857, %v2938
        %v2940 = vadd.f32 %v2894, %v2938
        %v2941 = vadd.f32 %v2931, %v2938
        %v2942 = vmax.f32 %v2939, 0.0
        %v2943 = vmax.f32 %v2940, 0.0
        %v2944 = vmax.f32 %v2941, 0.0
        %v2948 = vrot.slane %v2943, 7
        %v2949 = vrot.slane %v2944, 6
        %vm2950 = vcmask 1040384
        %v2951 = vsel %vm2950, %v2942, %v2948
        %vm2952 = vcmask 1041408
        %v2953 = vsel %vm2952, %v2951, %v2949
        %v2955 = vlaneseq
        %vm2956 = vcmp.ge.s32.totalorder %v2955, 0
        %vm2957 = vcmp.lt.s32.totalorder %v2955, 384
        %vm2958 = vmand %vm2956, %vm2957
        %2959 = vst.msk [vmem:[%s352] sm:$0x7] %vm2958, %v2953
        %s2960 = sand.u32 %s243, 1
        %s2961 = scalar_lea.sflag [#allocation4], %s2960
        %s2962 = sand.u32 %s243, 1
        %s2963 = smul.addr %s2962, 3
        %s2964 = scalar_lea.vmem [#allocation3], %s2963
        // Predicated region
        $region57: #{tpu_custom_call.1} parent=55 // pred_check
          %p2965 = pneg %p253
        $region58: #{tpu_custom_call.1} parent=55 // pred_check_branch
          %2967 = sbr.rel (%p2965) target = $region60
        $region59: #{tpu_custom_call.1} parent=55 // pred_region
          %s2968 = smul.u32 3, %s30
          %2970 = vsyncadd %s2961, 0
          %s2971 = smul.addr %s29, 3
          %s2972 = sadd.s32 %s2968, %s2971
          %s2973 = scalar_lea.hbm %s9, %s2972
          %s2975 = sshll.u32 %s2964, 4
          %s2976 = int_to_ptr.vmem [resolvable:$true] %s2975
          %s2977 = sshll.u32 %s2973, 4
          %s2978 = int_to_ptr.hbm [resolvable:$true] %s2977
          %2980 = dma.vmem_to_hbm [thread:$0]  %s2976, 48, %s2978, %s2961
        $region60: #{tpu_custom_call.1} parent=55 // pred_fallthru
          _
      $region56: #{tpu_custom_call.1} parent=5 // pred_fallthru
        _
      %p2981 = scmp.le.s32.totalorder 2, %s20
      // Predicated region
      $region61: #{tpu_custom_call.1} parent=5 // pred_check
        %p2982 = pneg %p2981
      $region62: #{tpu_custom_call.1} parent=5 // pred_check_branch
        %2984 = sbr.rel (%p2982) target = $region64
      $region63: #{tpu_custom_call.1} parent=5 // pred_region
        %s2985 = ssub.s32 %s20, 2
        // Predicated region
        $region65: #{tpu_custom_call.1} parent=63 // pred_check
          %p2986 = pneg %p259
        $region66: #{tpu_custom_call.1} parent=63 // pred_check_branch
          %2988 = sbr.rel (%p2986) target = $region68
        $region67: #{tpu_custom_call.1} parent=63 // pred_region
          %s2989 = sand.u32 %s244, 1
          %s2990 = scalar_lea.sflag [#allocation4], %s2989
          %s2991 = sand.u32 %s244, 1
          %s2992 = smul.addr %s2991, 3
          %s2993 = scalar_lea.vmem [#allocation3], %s2992
          %2995 = dma.done %s2990, 48
        $region68: #{tpu_custom_call.1} parent=63 // pred_fallthru
          _
      $region64: #{tpu_custom_call.1} parent=5 // pred_fallthru
        _
    $region6: #{tpu_custom_call.1} parent=1 // loop_footer
      %s24 = sadd.s32 1, %s20
    $region7: #{tpu_custom_call.1} parent=1 // loop_footer_branch
      %19 = sbr.rel target = $region3
    $region8: #{tpu_custom_call.1} parent=1 // loop_exit
      _
    %2996 = vsyncpa [#allocation4], 1
    %s2997 = scalar_lea.sflag [#allocation4], 1
    %2998 = vsyncpa %s2997, 1

</llo_original>
